<compile_context>
chip_gen: v7x
topology: tpu7x:2x2x1
jax: 0.10.0
libtpu: 0.0.40
codegen_flags: <defaults>
</compile_context>

<pallas_src>
import jax
import jax.numpy as jnp
from jax.experimental import pallas as pl
from jax.experimental.pallas import tpu as pltpu

HIDDEN = 256   # fixed by the module definition (enc_1 / dec_1 width)
LANE = 128     # TPU lane width


def _round_up(x, m):
    return (x + m - 1) // m * m


def _pad_to(a, shape):
    return jnp.pad(a, [(0, s - d) for d, s in zip(a.shape, shape)])


def vae_kernel(x_ref, eps_ref,
               we1_ref, be1_ref,    # enc_1          : (DP, 256), (1, 256)
               w2_ref, b2_ref,      # enc_21|enc_22  : (256, 2*LP), (1, 2*LP)  (fused, padded)
               wd1_ref, bd1_ref,    # dec_1          : (LP, 256), (1, 256)
               wd2_ref, bd2_ref,    # dec_2          : (256, DP), (1, DP)
               recon_ref, mean_ref, logvar_ref):
    x = x_ref[...]                                                   # (TB, DP)

    # ---- Encoder
    h1 = jnp.dot(x, we1_ref[...], preferred_element_type=jnp.float32) + be1_ref[...]
    h1 = jnp.maximum(h1, 0.0)                                        # relu

    # Fused mean / log_var projection: one MXU pass, then 128-aligned lane slices.
    stats = jnp.dot(h1, w2_ref[...], preferred_element_type=jnp.float32) + b2_ref[...]
    lp = mean_ref.shape[-1]
    mean = stats[:, :lp]
    log_var = stats[:, lp:]

    # ---- Reparameterization: z = eps * std + mean   (exp runs on the EUP)
    std = jnp.exp(0.5 * log_var)
    z = eps_ref[...] * std + mean

    # ---- Decoder
    h2 = jnp.dot(z, wd1_ref[...], preferred_element_type=jnp.float32) + bd1_ref[...]
    h2 = jnp.maximum(h2, 0.0)                                        # relu
    logits = jnp.dot(h2, wd2_ref[...], preferred_element_type=jnp.float32) + bd2_ref[...]

    recon_ref[...] = jax.nn.sigmoid(logits)
    mean_ref[...] = mean
    logvar_ref[...] = log_var


def vae_forward(x, eps, params, *, batch_tile=128):
    """Runs the full VAE forward in one Pallas kernel, tiled over the batch."""
    B, D = x.shape
    L = params["w21"].shape[1]

    DP = _round_up(D, LANE)                       # lane-dense input / recon width
    LP = _round_up(L, LANE)                       # lane-dense latent width
    bt = min(_round_up(batch_tile, 8), _round_up(B, 8))
    B_pad = _round_up(B, bt)                      # pad batch instead of asserting

    # --- zero-pad inputs (padding rows/lanes contribute exact zeros)
    x_p = _pad_to(x.astype(jnp.float32), (B_pad, DP))
    eps_p = _pad_to(eps.astype(jnp.float32), (B_pad, LP))

    # --- pad + fuse weights (all stored as (in, out); zero-padded lanes are exact)
    we1 = _pad_to(params["we1"], (DP, HIDDEN))
    be1 = params["be1"]
    w2 = jnp.concatenate([_pad_to(params["w21"], (HIDDEN, LP)),
                          _pad_to(params["w22"], (HIDDEN, LP))], axis=1)
    b2 = jnp.concatenate([_pad_to(params["b21"], (1, LP)),
                          _pad_to(params["b22"], (1, LP))], axis=1)
    wd1 = _pad_to(params["wd1"], (LP, HIDDEN))
    bd1 = params["bd1"]
    wd2 = _pad_to(params["wd2"], (HIDDEN, DP))
    bd2 = _pad_to(params["bd2"], (1, DP))

    def bmap(i):          # batch-tiled arrays
        return (i, 0)

    def wmap(i):          # weights / biases: same full block every step (no re-DMA)
        return (0, 0)

    in_specs = [
        pl.BlockSpec((bt, DP), bmap),             # x
        pl.BlockSpec((bt, LP), bmap),             # eps
        pl.BlockSpec((DP, HIDDEN), wmap),         # we1
        pl.BlockSpec((1, HIDDEN), wmap),          # be1
        pl.BlockSpec((HIDDEN, 2 * LP), wmap),     # fused w2 (enc_21|enc_22)
        pl.BlockSpec((1, 2 * LP), wmap),          # fused b2
        pl.BlockSpec((LP, HIDDEN), wmap),         # wd1
        pl.BlockSpec((1, HIDDEN), wmap),          # bd1
        pl.BlockSpec((HIDDEN, DP), wmap),         # wd2
        pl.BlockSpec((1, DP), wmap),              # bd2
    ]
    out_specs = [
        pl.BlockSpec((bt, DP), bmap),             # recon   (lane-dense)
        pl.BlockSpec((bt, LP), bmap),             # mean    (lane-dense)
        pl.BlockSpec((bt, LP), bmap),             # log_var (lane-dense)
    ]
    out_shape = [
        jax.ShapeDtypeStruct((B_pad, DP), jnp.float32),
        jax.ShapeDtypeStruct((B_pad, LP), jnp.float32),
        jax.ShapeDtypeStruct((B_pad, LP), jnp.float32),
    ]

    fn = pl.pallas_call(
        vae_kernel,
        out_shape=out_shape,
        grid_spec=pltpu.PrefetchScalarGridSpec(
            num_scalar_prefetch=0,
            grid=(B_pad // bt,),
            in_specs=in_specs,
            out_specs=out_specs,
        ),
        compiler_params=pltpu.CompilerParams(
            dimension_semantics=("parallel",)),    # batch axis shards across TCs
    )
    recon_p, mean_p, logvar_p = fn(x_p, eps_p, we1, be1, w2, b2, wd1, bd1, wd2, bd2)

    # strip the lane / batch padding
    return recon_p[:B, :D], mean_p[:B, :L], logvar_p[:B, :L]


def init_params(key, input_dim, latent_dim):
    """Deterministic synthetic parameters (shapes match the nn.Linear layers)."""
    ks = jax.random.split(key, 10)

    def lin(kw, kb, fan_in, fan_out):
        # PyTorch-like uniform(-1/sqrt(fan_in), 1/sqrt(fan_in)); stored as (in, out).
        bound = 1.0 / jnp.sqrt(fan_in)
        w = jax.random.uniform(kw, (fan_in, fan_out), jnp.float32, -bound, bound)
        b = jax.random.uniform(kb, (1, fan_out), jnp.float32, -bound, bound)
        return w, b

    we1, be1 = lin(ks[0], ks[1], input_dim, HIDDEN)
    w21, b21 = lin(ks[2], ks[3], HIDDEN, latent_dim)
    w22, b22 = lin(ks[4], ks[5], HIDDEN, latent_dim)
    wd1, bd1 = lin(ks[6], ks[7], latent_dim, HIDDEN)
    wd2, bd2 = lin(ks[8], ks[9], HIDDEN, input_dim)
    return dict(we1=we1, be1=be1, w21=w21, b21=b21, w22=w22, b22=b22,
                wd1=wd1, bd1=bd1, wd2=wd2, bd2=bd2)


def vae_reference(x, eps, p):
    """Pure-JAX reference mirroring the PyTorch forward exactly (unpadded params)."""
    h1 = jnp.maximum(x @ p["we1"] + p["be1"], 0.0)
    mean = h1 @ p["w21"] + p["b21"]
    log_var = h1 @ p["w22"] + p["b22"]
    z = eps * jnp.exp(0.5 * log_var) + mean
    h2 = jnp.maximum(z @ p["wd1"] + p["bd1"], 0.0)
    recon = jax.nn.sigmoid(h2 @ p["wd2"] + p["bd2"])
    return recon, mean, log_var


if __name__ == "__main__":
    key = jax.random.PRNGKey(0)
    k_param, k_x, k_eps = jax.random.split(key, 3)

    # Small feature dims (as implied by the module); batch sized so the grid has
    # >= 2 steps and both TensorCores get a tile on megacore parts.
    B, INPUT_DIM, LATENT_DIM = 256, 64, 16
    params = init_params(k_param, INPUT_DIM, LATENT_DIM)
    x = jax.random.normal(k_x, (B, INPUT_DIM), jnp.float32)
    eps = jax.random.normal(k_eps, (B, LATENT_DIM), jnp.float32)   # torch.randn_like(std)

    recon, mean, log_var = vae_forward(x, eps, params, batch_tile=128)
    jax.block_until_ready((recon, mean, log_var))

    r_ref, m_ref, lv_ref = vae_reference(x, eps, params)
    assert jnp.allclose(recon, r_ref, atol=1e-5, rtol=1e-5)
    assert jnp.allclose(mean, m_ref, atol=1e-5, rtol=1e-5)
    assert jnp.allclose(log_var, lv_ref, atol=1e-5, rtol=1e-5)

    print("KERNEL_OK")
</pallas_src>

<mosaic_0001>
module attributes {stable_mosaic.version = 11 : i64} {
  func.func @vae_kernel(%arg0: i32, %arg1: memref<128x128xf32, #tpu.memory_space<vmem>>, %arg2: memref<128x128xf32, #tpu.memory_space<vmem>>, %arg3: memref<128x256xf32, #tpu.memory_space<vmem>>, %arg4: memref<1x256xf32, #tpu.memory_space<vmem>>, %arg5: memref<256x256xf32, #tpu.memory_space<vmem>>, %arg6: memref<1x256xf32, #tpu.memory_space<vmem>>, %arg7: memref<128x256xf32, #tpu.memory_space<vmem>>, %arg8: memref<1x256xf32, #tpu.memory_space<vmem>>, %arg9: memref<256x128xf32, #tpu.memory_space<vmem>>, %arg10: memref<1x128xf32, #tpu.memory_space<vmem>>, %arg11: memref<128x128xf32, #tpu.memory_space<vmem>>, %arg12: memref<128x128xf32, #tpu.memory_space<vmem>>, %arg13: memref<128x128xf32, #tpu.memory_space<vmem>>) attributes {dimension_semantics = [#tpu.dimension_semantics<parallel>], iteration_bounds = array<i64: 2>, scalar_prefetch = 0 : i64, scratch_operands = 0 : i64, tpu.core_type = #tpu.core_type<tc>, window_params = [{transform_indices = @transform_0, window_bounds = array<i64: 128, 128>}, {transform_indices = @transform_1, window_bounds = array<i64: 128, 128>}, {pipeline_mode = #tpu.pipeline_mode<synchronous>, transform_indices = @transform_2, window_bounds = array<i64: 128, 256>}, {pipeline_mode = #tpu.pipeline_mode<synchronous>, transform_indices = @transform_3, window_bounds = array<i64: 1, 256>}, {pipeline_mode = #tpu.pipeline_mode<synchronous>, transform_indices = @transform_4, window_bounds = array<i64: 256, 256>}, {pipeline_mode = #tpu.pipeline_mode<synchronous>, transform_indices = @transform_5, window_bounds = array<i64: 1, 256>}, {pipeline_mode = #tpu.pipeline_mode<synchronous>, transform_indices = @transform_6, window_bounds = array<i64: 128, 256>}, {pipeline_mode = #tpu.pipeline_mode<synchronous>, transform_indices = @transform_7, window_bounds = array<i64: 1, 256>}, {pipeline_mode = #tpu.pipeline_mode<synchronous>, transform_indices = @transform_8, window_bounds = array<i64: 256, 128>}, {pipeline_mode = #tpu.pipeline_mode<synchronous>, transform_indices = @transform_9, window_bounds = array<i64: 1, 128>}, {transform_indices = @transform_10, window_bounds = array<i64: 128, 128>}, {transform_indices = @transform_11, window_bounds = array<i64: 128, 128>}, {transform_indices = @transform_12, window_bounds = array<i64: 128, 128>}]} {
    %c0 = arith.constant 0 : index
    %c0_0 = arith.constant 0 : index
    %0 = vector.load %arg1[%c0, %c0_0] : memref<128x128xf32, #tpu.memory_space<vmem>>, vector<128x128xf32>
    %c0_1 = arith.constant 0 : index
    %c0_2 = arith.constant 0 : index
    %1 = vector.load %arg3[%c0_1, %c0_2] : memref<128x256xf32, #tpu.memory_space<vmem>>, vector<128x256xf32>
    %cst = arith.constant dense<0.000000e+00> : vector<128x256xf32>
    %2 = tpu.matmul %0, %1, %cst {dimension_numbers = #tpu.dot_dimension_numbers<[1], [0], [0], [1], [0, 0, 1, 1], [], []>} : vector<128x128xf32>, vector<128x256xf32>, vector<128x256xf32> -> vector<128x256xf32>
    %c0_3 = arith.constant 0 : index
    %c0_4 = arith.constant 0 : index
    %3 = vector.load %arg4[%c0_3, %c0_4] : memref<1x256xf32, #tpu.memory_space<vmem>>, vector<1x256xf32>
    %4 = vector.broadcast %3 : vector<1x256xf32> to vector<128x256xf32>
    %5 = arith.addf %2, %4 : vector<128x256xf32>
    %cst_5 = arith.constant 0.000000e+00 : f32
    %6 = vector.broadcast %cst_5 : f32 to vector<128x256xf32>
    %7 = arith.maximumf %5, %6 : vector<128x256xf32>
    %c0_6 = arith.constant 0 : index
    %c0_7 = arith.constant 0 : index
    %8 = vector.load %arg5[%c0_6, %c0_7] : memref<256x256xf32, #tpu.memory_space<vmem>>, vector<256x256xf32>
    %cst_8 = arith.constant dense<0.000000e+00> : vector<128x256xf32>
    %9 = tpu.matmul %7, %8, %cst_8 {dimension_numbers = #tpu.dot_dimension_numbers<[1], [0], [0], [1], [0, 0, 1, 1], [], []>} : vector<128x256xf32>, vector<256x256xf32>, vector<128x256xf32> -> vector<128x256xf32>
    %c0_9 = arith.constant 0 : index
    %c0_10 = arith.constant 0 : index
    %10 = vector.load %arg6[%c0_9, %c0_10] : memref<1x256xf32, #tpu.memory_space<vmem>>, vector<1x256xf32>
    %11 = vector.broadcast %10 : vector<1x256xf32> to vector<128x256xf32>
    %12 = arith.addf %9, %11 : vector<128x256xf32>
    %13 = vector.extract_strided_slice %12 {offsets = [0, 0], sizes = [128, 128], strides = [1, 1]} : vector<128x256xf32> to vector<128x128xf32>
    %14 = vector.extract_strided_slice %12 {offsets = [0, 128], sizes = [128, 128], strides = [1, 1]} : vector<128x256xf32> to vector<128x128xf32>
    %cst_11 = arith.constant 5.000000e-01 : f32
    %15 = vector.broadcast %cst_11 : f32 to vector<128x128xf32>
    %16 = arith.mulf %15, %14 : vector<128x128xf32>
    %17 = math.exp %16 : vector<128x128xf32>
    %c0_12 = arith.constant 0 : index
    %c0_13 = arith.constant 0 : index
    %18 = vector.load %arg2[%c0_12, %c0_13] : memref<128x128xf32, #tpu.memory_space<vmem>>, vector<128x128xf32>
    %19 = arith.mulf %18, %17 : vector<128x128xf32>
    %20 = arith.addf %19, %13 : vector<128x128xf32>
    %c0_14 = arith.constant 0 : index
    %c0_15 = arith.constant 0 : index
    %21 = vector.load %arg7[%c0_14, %c0_15] : memref<128x256xf32, #tpu.memory_space<vmem>>, vector<128x256xf32>
    %cst_16 = arith.constant dense<0.000000e+00> : vector<128x256xf32>
    %22 = tpu.matmul %20, %21, %cst_16 {dimension_numbers = #tpu.dot_dimension_numbers<[1], [0], [0], [1], [0, 0, 1, 1], [], []>} : vector<128x128xf32>, vector<128x256xf32>, vector<128x256xf32> -> vector<128x256xf32>
    %c0_17 = arith.constant 0 : index
    %c0_18 = arith.constant 0 : index
    %23 = vector.load %arg8[%c0_17, %c0_18] : memref<1x256xf32, #tpu.memory_space<vmem>>, vector<1x256xf32>
    %24 = vector.broadcast %23 : vector<1x256xf32> to vector<128x256xf32>
    %25 = arith.addf %22, %24 : vector<128x256xf32>
    %cst_19 = arith.constant 0.000000e+00 : f32
    %26 = vector.broadcast %cst_19 : f32 to vector<128x256xf32>
    %27 = arith.maximumf %25, %26 : vector<128x256xf32>
    %c0_20 = arith.constant 0 : index
    %c0_21 = arith.constant 0 : index
    %28 = vector.load %arg9[%c0_20, %c0_21] : memref<256x128xf32, #tpu.memory_space<vmem>>, vector<256x128xf32>
    %cst_22 = arith.constant dense<0.000000e+00> : vector<128x128xf32>
    %29 = tpu.matmul %27, %28, %cst_22 {dimension_numbers = #tpu.dot_dimension_numbers<[1], [0], [0], [1], [0, 0, 1, 1], [], []>} : vector<128x256xf32>, vector<256x128xf32>, vector<128x128xf32> -> vector<128x128xf32>
    %c0_23 = arith.constant 0 : index
    %c0_24 = arith.constant 0 : index
    %30 = vector.load %arg10[%c0_23, %c0_24] : memref<1x128xf32, #tpu.memory_space<vmem>>, vector<1x128xf32>
    %31 = vector.broadcast %30 : vector<1x128xf32> to vector<128x128xf32>
    %32 = arith.addf %29, %31 : vector<128x128xf32>
    %33 = arith.negf %32 : vector<128x128xf32>
    %34 = math.exp %33 : vector<128x128xf32>
    %cst_25 = arith.constant 1.000000e+00 : f32
    %35 = vector.broadcast %cst_25 : f32 to vector<128x128xf32>
    %36 = arith.addf %35, %34 : vector<128x128xf32>
    %37 = arith.divf %35, %36 : vector<128x128xf32>
    %c0_26 = arith.constant 0 : index
    %c0_27 = arith.constant 0 : index
    %38 = vector.load %arg11[%c0_26, %c0_27] : memref<128x128xf32, #tpu.memory_space<vmem>>, vector<128x128xf32>
    tpu.vector_store %arg11[%c0_26, %c0_27], %37 {strides = array<i32>} : memref<128x128xf32, #tpu.memory_space<vmem>>, vector<128x128xf32>,
    %c0_28 = arith.constant 0 : index
    %c0_29 = arith.constant 0 : index
    %39 = vector.load %arg12[%c0_28, %c0_29] : memref<128x128xf32, #tpu.memory_space<vmem>>, vector<128x128xf32>
    tpu.vector_store %arg12[%c0_28, %c0_29], %13 {strides = array<i32>} : memref<128x128xf32, #tpu.memory_space<vmem>>, vector<128x128xf32>,
    %c0_30 = arith.constant 0 : index
    %c0_31 = arith.constant 0 : index
    %40 = vector.load %arg13[%c0_30, %c0_31] : memref<128x128xf32, #tpu.memory_space<vmem>>, vector<128x128xf32>
    tpu.vector_store %arg13[%c0_30, %c0_31], %14 {strides = array<i32>} : memref<128x128xf32, #tpu.memory_space<vmem>>, vector<128x128xf32>,
    return
  }
  func.func @transform_0(%arg0: i32) -> (i32, i32) {
    %c0_i32 = arith.constant 0 : i32
    %c0_i32_0 = arith.constant 0 : i32
    return %arg0, %c0_i32 : i32, i32
  }
  func.func @transform_1(%arg0: i32) -> (i32, i32) {
    %c0_i32 = arith.constant 0 : i32
    %c0_i32_0 = arith.constant 0 : i32
    return %arg0, %c0_i32 : i32, i32
  }
  func.func @transform_2(%arg0: i32) -> (i32, i32) {
    %c0_i32 = arith.constant 0 : i32
    %c0_i32_0 = arith.constant 0 : i32
    %c0_i32_1 = arith.constant 0 : i32
    return %c0_i32, %c0_i32_0 : i32, i32
  }
  func.func @transform_3(%arg0: i32) -> (i32, i32) {
    %c0_i32 = arith.constant 0 : i32
    %c0_i32_0 = arith.constant 0 : i32
    %c0_i32_1 = arith.constant 0 : i32
    return %c0_i32, %c0_i32_0 : i32, i32
  }
  func.func @transform_4(%arg0: i32) -> (i32, i32) {
    %c0_i32 = arith.constant 0 : i32
    %c0_i32_0 = arith.constant 0 : i32
    %c0_i32_1 = arith.constant 0 : i32
    return %c0_i32, %c0_i32_0 : i32, i32
  }
  func.func @transform_5(%arg0: i32) -> (i32, i32) {
    %c0_i32 = arith.constant 0 : i32
    %c0_i32_0 = arith.constant 0 : i32
    %c0_i32_1 = arith.constant 0 : i32
    return %c0_i32, %c0_i32_0 : i32, i32
  }
  func.func @transform_6(%arg0: i32) -> (i32, i32) {
    %c0_i32 = arith.constant 0 : i32
    %c0_i32_0 = arith.constant 0 : i32
    %c0_i32_1 = arith.constant 0 : i32
    return %c0_i32, %c0_i32_0 : i32, i32
  }
  func.func @transform_7(%arg0: i32) -> (i32, i32) {
    %c0_i32 = arith.constant 0 : i32
    %c0_i32_0 = arith.constant 0 : i32
    %c0_i32_1 = arith.constant 0 : i32
    return %c0_i32, %c0_i32_0 : i32, i32
  }
  func.func @transform_8(%arg0: i32) -> (i32, i32) {
    %c0_i32 = arith.constant 0 : i32
    %c0_i32_0 = arith.constant 0 : i32
    %c0_i32_1 = arith.constant 0 : i32
    return %c0_i32, %c0_i32_0 : i32, i32
  }
  func.func @transform_9(%arg0: i32) -> (i32, i32) {
    %c0_i32 = arith.constant 0 : i32
    %c0_i32_0 = arith.constant 0 : i32
    %c0_i32_1 = arith.constant 0 : i32
    return %c0_i32, %c0_i32_0 : i32, i32
  }
  func.func @transform_10(%arg0: i32) -> (i32, i32) {
    %c0_i32 = arith.constant 0 : i32
    %c0_i32_0 = arith.constant 0 : i32
    return %arg0, %c0_i32 : i32, i32
  }
  func.func @transform_11(%arg0: i32) -> (i32, i32) {
    %c0_i32 = arith.constant 0 : i32
    %c0_i32_0 = arith.constant 0 : i32
    return %arg0, %c0_i32 : i32, i32
  }
  func.func @transform_12(%arg0: i32) -> (i32, i32) {
    %c0_i32 = arith.constant 0 : i32
    %c0_i32_0 = arith.constant 0 : i32
    return %arg0, %c0_i32 : i32, i32
  }
}

</mosaic_0001>

<llo_original>
// kernel: tpu_custom_call.1
$region0: #{tpu_custom_call.1}
  #allocation0 [shape = 'u32[]', space=smem, size = 0x4, offset = 0x4, fixed_abs, tag = 'smem constant byte address 0x4 - core index']
  #allocation1 [shape = 'u32[144,128]{1,0:T(1,128)}', space=vmem, size = 0x12000, scoped, tag = 'internal scratch']
  %s0 = inlined_call_operand.hbm [shape: f32[256,128], index: 0, kind: input, shape index: {}]
  %s1 = inlined_call_operand.hbm [shape: f32[256,128], index: 1, kind: input, shape index: {}]
  %s2 = inlined_call_operand.hbm [shape: f32[128,256], index: 2, kind: input, shape index: {}]
  %s3 = inlined_call_operand.vmem [shape: f32[1,256], index: 3, kind: input, shape index: {}]
  %s4 = inlined_call_operand.hbm [shape: f32[256,256], index: 4, kind: input, shape index: {}]
  %s5 = inlined_call_operand.vmem [shape: f32[1,256], index: 5, kind: input, shape index: {}]
  %s6 = inlined_call_operand.hbm [shape: f32[128,256], index: 6, kind: input, shape index: {}]
  %s7 = inlined_call_operand.vmem [shape: f32[1,256], index: 7, kind: input, shape index: {}]
  %s8 = inlined_call_operand.hbm [shape: f32[256,128], index: 8, kind: input, shape index: {}]
  %s9 = inlined_call_operand.vmem [shape: f32[1,128], index: 9, kind: input, shape index: {}]
  %s10 = inlined_call_operand.hbm [shape: f32[256,128], index: 10, kind: output, shape index: {0}]
  %s11 = inlined_call_operand.hbm [shape: f32[256,128], index: 11, kind: output, shape index: {1}]
  %s12 = inlined_call_operand.hbm [shape: f32[256,128], index: 12, kind: output, shape index: {2}]
  %13 = xla_tuple %s10, %s11, %s12
  %s14 = sld [smem:[#allocation0]]
  $region113: #{tpu_custom_call.1} parent=0
    _
  %s16 = ssub.s32 1, %s14
  %s17 = scalar_select 0, %s16, %s14
  $region1: #{tpu_custom_call.1} parent=0
    #allocation2 [shape = 'u8[131072]{0}', space=vmem, size = 0x20000, scoped, tag = 'input window, operand 0']
    #allocation3 [shape = 's32[2]{0}', space=sflag, size = 0x8, scoped, tag = 'scoped memory for tpu_custom_call.1']
    #allocation4 [shape = 's32[2]{0}', space=sflag, size = 0x8, scoped, tag = 'scoped memory for tpu_custom_call.1']
    #allocation5 [shape = 'u8[131072]{0}', space=vmem, size = 0x20000, scoped, tag = 'input window, operand 1']
    #allocation6 [shape = 's32[2]{0}', space=sflag, size = 0x8, scoped, tag = 'scoped memory for tpu_custom_call.1']
    #allocation7 [shape = 'u8[131072]{0}', space=vmem, size = 0x20000, scoped, tag = 'input window, operand 2, single buffered']
    #allocation8 [shape = 'u8[262144]{0}', space=vmem, size = 0x40000, scoped, tag = 'input window, operand 4, single buffered']
    #allocation9 [shape = 's32[1]{0}', space=sflag, size = 0x4, scoped, tag = 'scoped memory for tpu_custom_call.1']
    #allocation10 [shape = 'u8[131072]{0}', space=vmem, size = 0x20000, scoped, tag = 'input window, operand 6, single buffered']
    #allocation11 [shape = 'u8[131072]{0}', space=vmem, size = 0x20000, scoped, tag = 'input window, operand 8, single buffered']
    #allocation12 [shape = 's32[1]{0}', space=sflag, size = 0x4, scoped, tag = 'scoped memory for tpu_custom_call.1']
    #allocation13 [shape = 'u8[131072]{0}', space=vmem, size = 0x20000, scoped, tag = 'output window, operand 0']
    #allocation14 [shape = 'u8[131072]{0}', space=vmem, size = 0x20000, scoped, tag = 'output window, operand 1']
    #allocation15 [shape = 's32[2]{0}', space=sflag, size = 0x8, scoped, tag = 'scoped memory for tpu_custom_call.1']
    #allocation16 [shape = 'u8[131072]{0}', space=vmem, size = 0x20000, scoped, tag = 'output window, operand 2']
    %18 = vsyncpa [#allocation3], 0
    %s19 = scalar_lea.sflag [#allocation3], 1
    %20 = vsyncpa %s19, 0
    %21 = vsyncpa [#allocation6], 0
    %s22 = scalar_lea.sflag [#allocation6], 1
    %23 = vsyncpa %s22, 0
    %24 = vsyncpa [#allocation9], 0
    %25 = vsyncpa [#allocation12], 0
    %26 = vsyncpa [#allocation4], 0
    %s27 = scalar_lea.sflag [#allocation4], 1
    %28 = vsyncpa %s27, 0
    %29 = vsyncpa [#allocation15], 0
    %s30 = scalar_lea.sflag [#allocation15], 1
    %31 = vsyncpa %s30, 0
    loop: start=0, step=1, limit=4
    $region2: #{tpu_custom_call.1} parent=1 // loop_pre_header
      _
    $region3: #{tpu_custom_call.1} parent=1 // loop_header
      %s33 = sphi 0, %s37
      %p34 = scmp.ge.s32.totalorder %s33, 4
      %s43 = sphi 0, %s45
      %s46 = sphi 0, %s43
      %s47 = sphi 0, %s46
      %s63 = sphi 0, %s47
      %s69 = sphi 0, %s71
      %s72 = sphi 0, %s69
      %s73 = sphi 0, %s72
      %s89 = sphi 0, %s73
      %s93 = sphi 0, %s93
      %s95 = sphi 0, %s93
      %s96 = sphi 0, %s95
      %s110 = sphi 0, %s96
      %s114 = sphi 0, %s114
      %s116 = sphi 0, %s114
      %s117 = sphi 0, %s116
      %s131 = sphi 0, %s117
      %s135 = sphi 0, %s135
      %s137 = sphi 0, %s135
      %s138 = sphi 0, %s137
      %s152 = sphi 0, %s138
      %s156 = sphi 0, %s156
      %s158 = sphi 0, %s156
      %s159 = sphi 0, %s158
      %s173 = sphi 0, %s159
      %s177 = sphi 0, %s177
      %s179 = sphi 0, %s177
      %s180 = sphi 0, %s179
      %s194 = sphi 0, %s180
      %s198 = sphi 0, %s198
      %s200 = sphi 0, %s198
      %s201 = sphi 0, %s200
      %s215 = sphi 0, %s201
      %s219 = sphi 0, %s219
      %s221 = sphi 0, %s219
      %s222 = sphi 0, %s221
      %s236 = sphi 0, %s222
      %s240 = sphi 0, %s240
      %s242 = sphi 0, %s240
      %s243 = sphi 0, %s242
      %s257 = sphi 0, %s243
      %s263 = sphi 0, %s265
      %s266 = sphi 0, %s263
      %s267 = sphi 0, %s266
      %s283 = sphi 0, %s267
      %s289 = sphi 0, %s291
      %s292 = sphi 0, %s289
      %s293 = sphi 0, %s292
      %s309 = sphi 0, %s293
      %s315 = sphi 0, %s317
      %s318 = sphi 0, %s315
      %s319 = sphi 0, %s318
      %s335 = sphi 0, %s319
    $region4: #{tpu_custom_call.1} parent=1 // loop_header_branch
      %36 = sbr.rel (%p34) target = $region8
    $region5: #{tpu_custom_call.1} parent=1 // loop_body
      %s38 = ssub.s32 %s33, 1
      %s39 = ssub.s32 %s33, 2
      %s40 = sadd.s32 %s33, 1
      %s41 = ssub.s32 %s33, %s40
      %p42 = scmp.eq.s32.totalorder %s41, 0
      %s44 = sadd.s32 %s43, 1
      %s45 = scalar_select %p42, %s43, %s44
      %p48 = pneg %p42
      %p49 = scmp.eq.s32.totalorder %s33, 1
      %p50 = por %p48, %p49
      %p51 = scmp.ne.s32.totalorder %s43, %s46
      %p52 = scmp.eq.s32.totalorder %s33, 0
      %p53 = por %p51, %p52
      %p54 = scmp.ne.s32.totalorder %s43, %s46
      %p55 = scmp.eq.s32.totalorder %s38, 1
      %p56 = por %p54, %p55
      %p57 = scmp.ne.s32.totalorder %s46, %s47
      %p58 = scmp.eq.s32.totalorder %s38, 0
      %p59 = por %p57, %p58
      %p60 = scmp.ne.s32.totalorder %s46, %s47
      %p61 = scmp.eq.s32.totalorder %s39, 1
      %p62 = por %p60, %p61
      %p64 = scmp.ne.s32.totalorder %s47, %s63
      %p65 = scmp.eq.s32.totalorder %s39, 0
      %p66 = por %p64, %p65
      %s67 = ssub.s32 %s33, %s40
      %p68 = scmp.eq.s32.totalorder %s67, 0
      %s70 = sadd.s32 %s69, 1
      %s71 = scalar_select %p68, %s69, %s70
      %p74 = pneg %p68
      %p75 = scmp.eq.s32.totalorder %s33, 1
      %p76 = por %p74, %p75
      %p77 = scmp.ne.s32.totalorder %s69, %s72
      %p78 = scmp.eq.s32.totalorder %s33, 0
      %p79 = por %p77, %p78
      %p80 = scmp.ne.s32.totalorder %s69, %s72
      %p81 = scmp.eq.s32.totalorder %s38, 1
      %p82 = por %p80, %p81
      %p83 = scmp.ne.s32.totalorder %s72, %s73
      %p84 = scmp.eq.s32.totalorder %s38, 0
      %p85 = por %p83, %p84
      %p86 = scmp.ne.s32.totalorder %s72, %s73
      %p87 = scmp.eq.s32.totalorder %s39, 1
      %p88 = por %p86, %p87
      %p90 = scmp.ne.s32.totalorder %s73, %s89
      %p91 = scmp.eq.s32.totalorder %s39, 0
      %p92 = por %p90, %p91
      %s94 = sadd.s32 %s93, 1
      %p97 = scmp.eq.s32.totalorder %s33, 1
      %p98 = scmp.ne.s32.totalorder %s93, %s95
      %p99 = scmp.eq.s32.totalorder %s33, 0
      %p100 = por %p98, %p99
      %p101 = scmp.ne.s32.totalorder %s93, %s95
      %p102 = scmp.eq.s32.totalorder %s38, 1
      %p103 = por %p101, %p102
      %p104 = scmp.ne.s32.totalorder %s95, %s96
      %p105 = scmp.eq.s32.totalorder %s38, 0
      %p106 = por %p104, %p105
      %p107 = scmp.ne.s32.totalorder %s95, %s96
      %p108 = scmp.eq.s32.totalorder %s39, 1
      %p109 = por %p107, %p108
      %p111 = scmp.ne.s32.totalorder %s96, %s110
      %p112 = scmp.eq.s32.totalorder %s39, 0
      %p113 = por %p111, %p112
      %s115 = sadd.s32 %s114, 1
      %p118 = scmp.eq.s32.totalorder %s33, 1
      %p119 = scmp.ne.s32.totalorder %s114, %s116
      %p120 = scmp.eq.s32.totalorder %s33, 0
      %p121 = por %p119, %p120
      %p122 = scmp.ne.s32.totalorder %s114, %s116
      %p123 = scmp.eq.s32.totalorder %s38, 1
      %p124 = por %p122, %p123
      %p125 = scmp.ne.s32.totalorder %s116, %s117
      %p126 = scmp.eq.s32.totalorder %s38, 0
      %p127 = por %p125, %p126
      %p128 = scmp.ne.s32.totalorder %s116, %s117
      %p129 = scmp.eq.s32.totalorder %s39, 1
      %p130 = por %p128, %p129
      %p132 = scmp.ne.s32.totalorder %s117, %s131
      %p133 = scmp.eq.s32.totalorder %s39, 0
      %p134 = por %p132, %p133
      %s136 = sadd.s32 %s135, 1
      %p139 = scmp.eq.s32.totalorder %s33, 1
      %p140 = scmp.ne.s32.totalorder %s135, %s137
      %p141 = scmp.eq.s32.totalorder %s33, 0
      %p142 = por %p140, %p141
      %p143 = scmp.ne.s32.totalorder %s135, %s137
      %p144 = scmp.eq.s32.totalorder %s38, 1
      %p145 = por %p143, %p144
      %p146 = scmp.ne.s32.totalorder %s137, %s138
      %p147 = scmp.eq.s32.totalorder %s38, 0
      %p148 = por %p146, %p147
      %p149 = scmp.ne.s32.totalorder %s137, %s138
      %p150 = scmp.eq.s32.totalorder %s39, 1
      %p151 = por %p149, %p150
      %p153 = scmp.ne.s32.totalorder %s138, %s152
      %p154 = scmp.eq.s32.totalorder %s39, 0
      %p155 = por %p153, %p154
      %s157 = sadd.s32 %s156, 1
      %p160 = scmp.eq.s32.totalorder %s33, 1
      %p161 = scmp.ne.s32.totalorder %s156, %s158
      %p162 = scmp.eq.s32.totalorder %s33, 0
      %p163 = por %p161, %p162
      %p164 = scmp.ne.s32.totalorder %s156, %s158
      %p165 = scmp.eq.s32.totalorder %s38, 1
      %p166 = por %p164, %p165
      %p167 = scmp.ne.s32.totalorder %s158, %s159
      %p168 = scmp.eq.s32.totalorder %s38, 0
      %p169 = por %p167, %p168
      %p170 = scmp.ne.s32.totalorder %s158, %s159
      %p171 = scmp.eq.s32.totalorder %s39, 1
      %p172 = por %p170, %p171
      %p174 = scmp.ne.s32.totalorder %s159, %s173
      %p175 = scmp.eq.s32.totalorder %s39, 0
      %p176 = por %p174, %p175
      %s178 = sadd.s32 %s177, 1
      %p181 = scmp.eq.s32.totalorder %s33, 1
      %p182 = scmp.ne.s32.totalorder %s177, %s179
      %p183 = scmp.eq.s32.totalorder %s33, 0
      %p184 = por %p182, %p183
      %p185 = scmp.ne.s32.totalorder %s177, %s179
      %p186 = scmp.eq.s32.totalorder %s38, 1
      %p187 = por %p185, %p186
      %p188 = scmp.ne.s32.totalorder %s179, %s180
      %p189 = scmp.eq.s32.totalorder %s38, 0
      %p190 = por %p188, %p189
      %p191 = scmp.ne.s32.totalorder %s179, %s180
      %p192 = scmp.eq.s32.totalorder %s39, 1
      %p193 = por %p191, %p192
      %p195 = scmp.ne.s32.totalorder %s180, %s194
      %p196 = scmp.eq.s32.totalorder %s39, 0
      %p197 = por %p195, %p196
      %s199 = sadd.s32 %s198, 1
      %p202 = scmp.eq.s32.totalorder %s33, 1
      %p203 = scmp.ne.s32.totalorder %s198, %s200
      %p204 = scmp.eq.s32.totalorder %s33, 0
      %p205 = por %p203, %p204
      %p206 = scmp.ne.s32.totalorder %s198, %s200
      %p207 = scmp.eq.s32.totalorder %s38, 1
      %p208 = por %p206, %p207
      %p209 = scmp.ne.s32.totalorder %s200, %s201
      %p210 = scmp.eq.s32.totalorder %s38, 0
      %p211 = por %p209, %p210
      %p212 = scmp.ne.s32.totalorder %s200, %s201
      %p213 = scmp.eq.s32.totalorder %s39, 1
      %p214 = por %p212, %p213
      %p216 = scmp.ne.s32.totalorder %s201, %s215
      %p217 = scmp.eq.s32.totalorder %s39, 0
      %p218 = por %p216, %p217
      %s220 = sadd.s32 %s219, 1
      %p223 = scmp.eq.s32.totalorder %s33, 1
      %p224 = scmp.ne.s32.totalorder %s219, %s221
      %p225 = scmp.eq.s32.totalorder %s33, 0
      %p226 = por %p224, %p225
      %p227 = scmp.ne.s32.totalorder %s219, %s221
      %p228 = scmp.eq.s32.totalorder %s38, 1
      %p229 = por %p227, %p228
      %p230 = scmp.ne.s32.totalorder %s221, %s222
      %p231 = scmp.eq.s32.totalorder %s38, 0
      %p232 = por %p230, %p231
      %p233 = scmp.ne.s32.totalorder %s221, %s222
      %p234 = scmp.eq.s32.totalorder %s39, 1
      %p235 = por %p233, %p234
      %p237 = scmp.ne.s32.totalorder %s222, %s236
      %p238 = scmp.eq.s32.totalorder %s39, 0
      %p239 = por %p237, %p238
      %s241 = sadd.s32 %s240, 1
      %p244 = scmp.eq.s32.totalorder %s33, 1
      %p245 = scmp.ne.s32.totalorder %s240, %s242
      %p246 = scmp.eq.s32.totalorder %s33, 0
      %p247 = por %p245, %p246
      %p248 = scmp.ne.s32.totalorder %s240, %s242
      %p249 = scmp.eq.s32.totalorder %s38, 1
      %p250 = por %p248, %p249
      %p251 = scmp.ne.s32.totalorder %s242, %s243
      %p252 = scmp.eq.s32.totalorder %s38, 0
      %p253 = por %p251, %p252
      %p254 = scmp.ne.s32.totalorder %s242, %s243
      %p255 = scmp.eq.s32.totalorder %s39, 1
      %p256 = por %p254, %p255
      %p258 = scmp.ne.s32.totalorder %s243, %s257
      %p259 = scmp.eq.s32.totalorder %s39, 0
      %p260 = por %p258, %p259
      %s261 = ssub.s32 %s33, %s40
      %p262 = scmp.eq.s32.totalorder %s261, 0
      %s264 = sadd.s32 %s263, 1
      %s265 = scalar_select %p262, %s263, %s264
      %p268 = pneg %p262
      %p269 = scmp.eq.s32.totalorder %s33, 1
      %p270 = por %p268, %p269
      %p271 = scmp.ne.s32.totalorder %s263, %s266
      %p272 = scmp.eq.s32.totalorder %s33, 0
      %p273 = por %p271, %p272
      %p274 = scmp.ne.s32.totalorder %s263, %s266
      %p275 = scmp.eq.s32.totalorder %s38, 1
      %p276 = por %p274, %p275
      %p277 = scmp.ne.s32.totalorder %s266, %s267
      %p278 = scmp.eq.s32.totalorder %s38, 0
      %p279 = por %p277, %p278
      %p280 = scmp.ne.s32.totalorder %s266, %s267
      %p281 = scmp.eq.s32.totalorder %s39, 1
      %p282 = por %p280, %p281
      %p284 = scmp.ne.s32.totalorder %s267, %s283
      %p285 = scmp.eq.s32.totalorder %s39, 0
      %p286 = por %p284, %p285
      %s287 = ssub.s32 %s33, %s40
      %p288 = scmp.eq.s32.totalorder %s287, 0
      %s290 = sadd.s32 %s289, 1
      %s291 = scalar_select %p288, %s289, %s290
      %p294 = pneg %p288
      %p295 = scmp.eq.s32.totalorder %s33, 1
      %p296 = por %p294, %p295
      %p297 = scmp.ne.s32.totalorder %s289, %s292
      %p298 = scmp.eq.s32.totalorder %s33, 0
      %p299 = por %p297, %p298
      %p300 = scmp.ne.s32.totalorder %s289, %s292
      %p301 = scmp.eq.s32.totalorder %s38, 1
      %p302 = por %p300, %p301
      %p303 = scmp.ne.s32.totalorder %s292, %s293
      %p304 = scmp.eq.s32.totalorder %s38, 0
      %p305 = por %p303, %p304
      %p306 = scmp.ne.s32.totalorder %s292, %s293
      %p307 = scmp.eq.s32.totalorder %s39, 1
      %p308 = por %p306, %p307
      %p310 = scmp.ne.s32.totalorder %s293, %s309
      %p311 = scmp.eq.s32.totalorder %s39, 0
      %p312 = por %p310, %p311
      %s313 = ssub.s32 %s33, %s40
      %p314 = scmp.eq.s32.totalorder %s313, 0
      %s316 = sadd.s32 %s315, 1
      %s317 = scalar_select %p314, %s315, %s316
      %p320 = pneg %p314
      %p321 = scmp.eq.s32.totalorder %s33, 1
      %p322 = por %p320, %p321
      %p323 = scmp.ne.s32.totalorder %s315, %s318
      %p324 = scmp.eq.s32.totalorder %s33, 0
      %p325 = por %p323, %p324
      %p326 = scmp.ne.s32.totalorder %s315, %s318
      %p327 = scmp.eq.s32.totalorder %s38, 1
      %p328 = por %p326, %p327
      %p329 = scmp.ne.s32.totalorder %s318, %s319
      %p330 = scmp.eq.s32.totalorder %s38, 0
      %p331 = por %p329, %p330
      %p332 = scmp.ne.s32.totalorder %s318, %s319
      %p333 = scmp.eq.s32.totalorder %s39, 1
      %p334 = por %p332, %p333
      %p336 = scmp.ne.s32.totalorder %s319, %s335
      %p337 = scmp.eq.s32.totalorder %s39, 0
      %p338 = por %p336, %p337
      %p339 = scmp.le.s32.totalorder 1, %s33
      %p340 = scmp.lt.s32.totalorder %s33, 3
      %p341 = pnand %p339, %p340
      %p342 = pneg %p341
      // Predicated region
      $region9: #{tpu_custom_call.1} parent=5 // pred_check
        _
      $region10: #{tpu_custom_call.1} parent=5 // pred_check_branch
        %344 = sbr.rel (%p341) target = $region12
      $region11: #{tpu_custom_call.1} parent=5 // pred_region
        %s345 = ssub.s32 %s33, 1
        // Predicated region
        $region13: #{tpu_custom_call.1} parent=11 // pred_check
          %p346 = pneg %p106
        $region14: #{tpu_custom_call.1} parent=11 // pred_check_branch
          %348 = sbr.rel (%p346) target = $region16
        $region15: #{tpu_custom_call.1} parent=11 // pred_region
          %s350 = ssub.s32 4096, 4096
          %351 = vsyncadd [#allocation6], %s350
          %s352 = sshll.u32 [#allocation7], 4
          %s353 = int_to_ptr.vmem [resolvable:$true] %s352
          %358 = dma.hbm_to_vmem [thread:$0]  %s2, 4096, %s353, [#allocation6], 256, 256, 16
        $region16: #{tpu_custom_call.1} parent=11 // pred_fallthru
          _
        // Predicated region
        $region17: #{tpu_custom_call.1} parent=11 // pred_check
          %p359 = pneg %p127
        $region18: #{tpu_custom_call.1} parent=11 // pred_check_branch
          %361 = sbr.rel (%p359) target = $region20
        $region19: #{tpu_custom_call.1} parent=11 // pred_region
          _
        $region20: #{tpu_custom_call.1} parent=11 // pred_fallthru
          _
        // Predicated region
        $region21: #{tpu_custom_call.1} parent=11 // pred_check
          %p362 = pneg %p148
        $region22: #{tpu_custom_call.1} parent=11 // pred_check_branch
          %364 = sbr.rel (%p362) target = $region24
        $region23: #{tpu_custom_call.1} parent=11 // pred_region
          %s366 = ssub.s32 8192, 8192
          %367 = vsyncadd [#allocation9], %s366
          %s368 = sshll.u32 [#allocation8], 4
          %s369 = int_to_ptr.vmem [resolvable:$true] %s368
          %374 = dma.hbm_to_vmem [thread:$0]  %s4, 8192, %s369, [#allocation9], 256, 256, 16
        $region24: #{tpu_custom_call.1} parent=11 // pred_fallthru
          _
        // Predicated region
        $region25: #{tpu_custom_call.1} parent=11 // pred_check
          %p375 = pneg %p169
        $region26: #{tpu_custom_call.1} parent=11 // pred_check_branch
          %377 = sbr.rel (%p375) target = $region28
        $region27: #{tpu_custom_call.1} parent=11 // pred_region
          _
        $region28: #{tpu_custom_call.1} parent=11 // pred_fallthru
          _
        // Predicated region
        $region29: #{tpu_custom_call.1} parent=11 // pred_check
          %p378 = pneg %p190
        $region30: #{tpu_custom_call.1} parent=11 // pred_check_branch
          %380 = sbr.rel (%p378) target = $region32
        $region31: #{tpu_custom_call.1} parent=11 // pred_region
          %s382 = ssub.s32 4096, 4096
          %383 = vsyncadd [#allocation9], %s382
          %s384 = sshll.u32 [#allocation10], 4
          %s385 = int_to_ptr.vmem [resolvable:$true] %s384
          %390 = dma.hbm_to_vmem [thread:$0]  %s6, 4096, %s385, [#allocation9], 256, 256, 16
        $region32: #{tpu_custom_call.1} parent=11 // pred_fallthru
          _
        // Predicated region
        $region33: #{tpu_custom_call.1} parent=11 // pred_check
          %p391 = pneg %p211
        $region34: #{tpu_custom_call.1} parent=11 // pred_check_branch
          %393 = sbr.rel (%p391) target = $region36
        $region35: #{tpu_custom_call.1} parent=11 // pred_region
          _
        $region36: #{tpu_custom_call.1} parent=11 // pred_fallthru
          _
        // Predicated region
        $region37: #{tpu_custom_call.1} parent=11 // pred_check
          %p394 = pneg %p232
        $region38: #{tpu_custom_call.1} parent=11 // pred_check_branch
          %396 = sbr.rel (%p394) target = $region40
        $region39: #{tpu_custom_call.1} parent=11 // pred_region
          %s398 = ssub.s32 4096, 4096
          %399 = vsyncadd [#allocation12], %s398
          %s400 = sshll.u32 [#allocation11], 4
          %s401 = int_to_ptr.vmem [resolvable:$true] %s400
          %406 = dma.hbm_to_vmem [thread:$0]  %s8, 4096, %s401, [#allocation12], 128, 128, 8
        $region40: #{tpu_custom_call.1} parent=11 // pred_fallthru
          _
        // Predicated region
        $region41: #{tpu_custom_call.1} parent=11 // pred_check
          %p407 = pneg %p253
        $region42: #{tpu_custom_call.1} parent=11 // pred_check_branch
          %409 = sbr.rel (%p407) target = $region44
        $region43: #{tpu_custom_call.1} parent=11 // pred_region
          _
        $region44: #{tpu_custom_call.1} parent=11 // pred_fallthru
          _
      $region12: #{tpu_custom_call.1} parent=5 // pred_fallthru
        _
      %p410 = scmp.lt.s32.totalorder %s33, 2
      // Predicated region
      $region45: #{tpu_custom_call.1} parent=5 // pred_check
        %p411 = pneg %p410
      $region46: #{tpu_custom_call.1} parent=5 // pred_check_branch
        %413 = sbr.rel (%p411) target = $region48
      $region47: #{tpu_custom_call.1} parent=5 // pred_region
        // Predicated region
        $region49: #{tpu_custom_call.1} parent=47 // pred_check
          %p414 = pneg %p53
        $region50: #{tpu_custom_call.1} parent=47 // pred_check_branch
          %416 = sbr.rel (%p414) target = $region52
        $region51: #{tpu_custom_call.1} parent=47 // pred_region
          %s417 = sand.u32 %s43, 1
          %s418 = scalar_lea.sflag [#allocation3], %s417
          %s419 = sand.u32 %s43, 1
          %s420 = smul.addr %s419, 128
          %s421 = scalar_lea.vmem [#allocation2], %s420
          %s422 = smul.u32 16, %s33
          %s424 = ssub.s32 2048, 2048
          %425 = vsyncadd %s418, %s424
          %s426 = smul.addr %s422, 128
          %s427 = scalar_lea.hbm %s0, %s426
          %s428 = sshll.u32 %s421, 4
          %s429 = int_to_ptr.vmem [resolvable:$true] %s428
          %434 = dma.hbm_to_vmem [thread:$0]  %s427, 2048, %s429, %s418, 128, 128, 8
        $region52: #{tpu_custom_call.1} parent=47 // pred_fallthru
          _
        // Predicated region
        $region53: #{tpu_custom_call.1} parent=47 // pred_check
          %p435 = pneg %p79
        $region54: #{tpu_custom_call.1} parent=47 // pred_check_branch
          %437 = sbr.rel (%p435) target = $region56
        $region55: #{tpu_custom_call.1} parent=47 // pred_region
          %s438 = sand.u32 %s33, 1
          %s439 = scalar_lea.sflag [#allocation6], %s438
          %s440 = sand.u32 %s69, 1
          %s441 = smul.addr %s440, 128
          %s442 = scalar_lea.vmem [#allocation5], %s441
          %s443 = smul.u32 16, %s33
          %s445 = ssub.s32 2048, 2048
          %446 = vsyncadd %s439, %s445
          %s447 = smul.addr %s443, 128
          %s448 = scalar_lea.hbm %s1, %s447
          %s449 = sshll.u32 %s442, 4
          %s450 = int_to_ptr.vmem [resolvable:$true] %s449
          %455 = dma.hbm_to_vmem [thread:$0]  %s448, 2048, %s450, %s439, 128, 128, 8
        $region56: #{tpu_custom_call.1} parent=47 // pred_fallthru
          _
      $region48: #{tpu_custom_call.1} parent=5 // pred_fallthru
        _
      %p456 = scmp.le.s32.totalorder 1, %s33
      %p457 = scmp.lt.s32.totalorder %s33, 3
      %p458 = pnand %p456, %p457
      %p459 = pneg %p458
      // Predicated region
      $region57: #{tpu_custom_call.1} parent=5 // pred_check
        _
      $region58: #{tpu_custom_call.1} parent=5 // pred_check_branch
        %461 = sbr.rel (%p458) target = $region60
      $region59: #{tpu_custom_call.1} parent=5 // pred_region
        %s462 = ssub.s32 %s33, 1
        %s463 = sand.u32 %s46, 1
        %s464 = scalar_lea.sflag [#allocation3], %s463
        %s465 = sand.u32 %s46, 1
        %s466 = smul.addr %s465, 128
        %s467 = scalar_lea.vmem [#allocation2], %s466
        // Predicated region
        $region61: #{tpu_custom_call.1} parent=59 // pred_check
          %p468 = pneg %p59
        $region62: #{tpu_custom_call.1} parent=59 // pred_check_branch
          %470 = sbr.rel (%p468) target = $region64
        $region63: #{tpu_custom_call.1} parent=59 // pred_region
          %471 = dma.done %s464, 2048
        $region64: #{tpu_custom_call.1} parent=59 // pred_fallthru
          _
        %s472 = sand.u32 %s38, 1
        %s473 = scalar_lea.sflag [#allocation6], %s472
        %s474 = sand.u32 %s72, 1
        %s475 = smul.addr %s474, 128
        %s476 = scalar_lea.vmem [#allocation5], %s475
        // Predicated region
        $region65: #{tpu_custom_call.1} parent=59 // pred_check
          %p477 = pneg %p85
        $region66: #{tpu_custom_call.1} parent=59 // pred_check_branch
          %479 = sbr.rel (%p477) target = $region68
        $region67: #{tpu_custom_call.1} parent=59 // pred_region
          %480 = dma.done %s473, 2048
        $region68: #{tpu_custom_call.1} parent=59 // pred_fallthru
          _
        // Predicated region
        $region69: #{tpu_custom_call.1} parent=59 // pred_check
          %p481 = pneg %p106
        $region70: #{tpu_custom_call.1} parent=59 // pred_check_branch
          %483 = sbr.rel (%p481) target = $region72
        $region71: #{tpu_custom_call.1} parent=59 // pred_region
          %484 = dma.done [#allocation6], 4096
        $region72: #{tpu_custom_call.1} parent=59 // pred_fallthru
          _
        // Predicated region
        $region73: #{tpu_custom_call.1} parent=59 // pred_check
          %p485 = pneg %p148
        $region74: #{tpu_custom_call.1} parent=59 // pred_check_branch
          %487 = sbr.rel (%p485) target = $region76
        $region75: #{tpu_custom_call.1} parent=59 // pred_region
          %488 = dma.done [#allocation9], 8192
        $region76: #{tpu_custom_call.1} parent=59 // pred_fallthru
          _
        // Predicated region
        $region77: #{tpu_custom_call.1} parent=59 // pred_check
          %p489 = pneg %p190
        $region78: #{tpu_custom_call.1} parent=59 // pred_check_branch
          %491 = sbr.rel (%p489) target = $region80
        $region79: #{tpu_custom_call.1} parent=59 // pred_region
          %492 = dma.done [#allocation9], 4096
        $region80: #{tpu_custom_call.1} parent=59 // pred_fallthru
          _
        // Predicated region
        $region81: #{tpu_custom_call.1} parent=59 // pred_check
          %p493 = pneg %p232
        $region82: #{tpu_custom_call.1} parent=59 // pred_check_branch
          %495 = sbr.rel (%p493) target = $region84
        $region83: #{tpu_custom_call.1} parent=59 // pred_region
          %496 = dma.done [#allocation12], 4096
        $region84: #{tpu_custom_call.1} parent=59 // pred_fallthru
          _
        %s497 = sand.u32 %s46, 1
        %s498 = scalar_lea.sflag [#allocation3], %s497
        %s499 = sand.u32 %s46, 1
        %s500 = smul.addr %s499, 128
        %s501 = scalar_lea.vmem [#allocation2], %s500
        %p502 = pneg %p59
        %p503 = pneg %p56
        %s504 = sand.u32 %s38, 1
        %s505 = scalar_lea.sflag [#allocation6], %s504
        %s506 = sand.u32 %s72, 1
        %s507 = smul.addr %s506, 128
        %s508 = scalar_lea.vmem [#allocation5], %s507
        %p509 = pneg %p85
        %p510 = pneg %p82
        %p511 = pneg %p106
        %p512 = pneg %p103
        %p513 = pneg %p127
        %p514 = pneg %p124
        %p515 = pneg %p148
        %p516 = pneg %p145
        %p517 = pneg %p169
        %p518 = pneg %p166
        %p519 = pneg %p190
        %p520 = pneg %p187
        %p521 = pneg %p211
        %p522 = pneg %p208
        %p523 = pneg %p232
        %p524 = pneg %p229
        %p525 = pneg %p253
        %p526 = pneg %p250
        %p527 = pneg %p279
        %p528 = pneg %p276
        %s529 = sand.u32 %s266, 1
        %s530 = scalar_lea.sflag [#allocation4], %s529
        %s531 = sand.u32 %s266, 1
        %s532 = smul.addr %s531, 128
        %s533 = scalar_lea.vmem [#allocation13], %s532
        %p534 = pneg %p305
        %p535 = pneg %p302
        %s536 = sand.u32 %s38, 1
        %s537 = scalar_lea.sflag [#allocation15], %s536
        %s538 = sand.u32 %s292, 1
        %s539 = smul.addr %s538, 128
        %s540 = scalar_lea.vmem [#allocation14], %s539
        %p541 = pneg %p331
        %p542 = pneg %p328
        %s543 = sand.u32 %s38, 1
        %s544 = scalar_lea.sflag [#allocation15], %s543
        %s545 = sand.u32 %s318, 1
        %s546 = smul.addr %s545, 128
        %s547 = scalar_lea.vmem [#allocation16], %s546
        %s548 = smul.u32 16, %s38
        %s549 = smul.u32 16, %s38
        %s550 = smul.u32 16, %s38
        %s551 = smul.u32 16, %s38
        %s552 = smul.u32 16, %s38
        %v553 = vld [vmem:[%s467] sm:$0xff]
        %v554 = vld [vmem:[%s467 + $0x8] sm:$0xff]
        %v555 = vld [vmem:[%s467 + $0x10] sm:$0xff]
        %v556 = vld [vmem:[%s467 + $0x18] sm:$0xff]
        %v557 = vld [vmem:[%s467 + $0x20] sm:$0xff]
        %v558 = vld [vmem:[%s467 + $0x28] sm:$0xff]
        %v559 = vld [vmem:[%s467 + $0x30] sm:$0xff]
        %v560 = vld [vmem:[%s467 + $0x38] sm:$0xff]
        %v561 = vld [vmem:[%s467 + $0x40] sm:$0xff]
        %v562 = vld [vmem:[%s467 + $0x48] sm:$0xff]
        %v563 = vld [vmem:[%s467 + $0x50] sm:$0xff]
        %v564 = vld [vmem:[%s467 + $0x58] sm:$0xff]
        %v565 = vld [vmem:[%s467 + $0x60] sm:$0xff]
        %v566 = vld [vmem:[%s467 + $0x68] sm:$0xff]
        %v567 = vld [vmem:[%s467 + $0x70] sm:$0xff]
        %v568 = vld [vmem:[%s467 + $0x78] sm:$0xff]
        %v569 = vld [vmem:[#allocation7] sm:$0xff]
        %v570 = vld [vmem:[#allocation7 + $0x8] sm:$0xff]
        %v571 = vld [vmem:[#allocation7 + $0x10] sm:$0xff]
        %v572 = vld [vmem:[#allocation7 + $0x18] sm:$0xff]
        %v573 = vld [vmem:[#allocation7 + $0x20] sm:$0xff]
        %v574 = vld [vmem:[#allocation7 + $0x28] sm:$0xff]
        %v575 = vld [vmem:[#allocation7 + $0x30] sm:$0xff]
        %v576 = vld [vmem:[#allocation7 + $0x38] sm:$0xff]
        %v577 = vld [vmem:[#allocation7 + $0x40] sm:$0xff]
        %v578 = vld [vmem:[#allocation7 + $0x48] sm:$0xff]
        %v579 = vld [vmem:[#allocation7 + $0x50] sm:$0xff]
        %v580 = vld [vmem:[#allocation7 + $0x58] sm:$0xff]
        %v581 = vld [vmem:[#allocation7 + $0x60] sm:$0xff]
        %v582 = vld [vmem:[#allocation7 + $0x68] sm:$0xff]
        %v583 = vld [vmem:[#allocation7 + $0x70] sm:$0xff]
        %v584 = vld [vmem:[#allocation7 + $0x78] sm:$0xff]
        %v585 = vld [vmem:[#allocation7 + $0x80] sm:$0xff]
        %v586 = vld [vmem:[#allocation7 + $0x88] sm:$0xff]
        %v587 = vld [vmem:[#allocation7 + $0x90] sm:$0xff]
        %v588 = vld [vmem:[#allocation7 + $0x98] sm:$0xff]
        %v589 = vld [vmem:[#allocation7 + $0xa0] sm:$0xff]
        %v590 = vld [vmem:[#allocation7 + $0xa8] sm:$0xff]
        %v591 = vld [vmem:[#allocation7 + $0xb0] sm:$0xff]
        %v592 = vld [vmem:[#allocation7 + $0xb8] sm:$0xff]
        %v593 = vld [vmem:[#allocation7 + $0xc0] sm:$0xff]
        %v594 = vld [vmem:[#allocation7 + $0xc8] sm:$0xff]
        %v595 = vld [vmem:[#allocation7 + $0xd0] sm:$0xff]
        %v596 = vld [vmem:[#allocation7 + $0xd8] sm:$0xff]
        %v597 = vld [vmem:[#allocation7 + $0xe0] sm:$0xff]
        %v598 = vld [vmem:[#allocation7 + $0xe8] sm:$0xff]
        %v599 = vld [vmem:[#allocation7 + $0xf0] sm:$0xff]
        %v600 = vld [vmem:[#allocation7 + $0xf8] sm:$0xff]
        %v601 = vld [vmem:[%s3] sm:$0x3]
        %v603 = vlaneseq
        %v604 = vshrl.u32 %v603, 7
        %v605 = vsub.s32 0, %v604
        %v606 = vrot.slane %v601, %v605
        %v607 = vlaneseq
        %v608 = vshrl.u32 %v607, 7
        %v609 = vsub.s32 1, %v608
        %v610 = vrot.slane %v601, %v609
        %613 = vmatprep.subr.mxu0 %v570
        %614 = vmatpush1.msra.mxu0 %v569
        %615 = vmatprep.subr.mxu0 %v572
        %616 = vmatpush1.msra.mxu0 %v571
        %617 = vmatprep.subr.mxu0 %v574
        %618 = vmatpush1.msra.mxu0 %v573
        %619 = vmatprep.subr.mxu0 %v576
        %620 = vmatpush1.msra.mxu0 %v575
        %621 = vmatprep.subr.mxu0 %v578
        %622 = vmatpush1.msra.mxu0 %v577
        %623 = vmatprep.subr.mxu0 %v580
        %624 = vmatpush1.msra.mxu0 %v579
        %625 = vmatprep.subr.mxu0 %v582
        %626 = vmatpush1.msra.mxu0 %v581
        %627 = vmatprep.subr.mxu0 %v584
        %628 = vmatpush1.msra.mxu0 %v583
        %629 = vmatprep.subr.mxu0 %v586
        %630 = vmatpush1.msra.mxu0 %v585
        %631 = vmatprep.subr.mxu0 %v588
        %632 = vmatpush1.msra.mxu0 %v587
        %633 = vmatprep.subr.mxu0 %v590
        %634 = vmatpush1.msra.mxu0 %v589
        %635 = vmatprep.subr.mxu0 %v592
        %636 = vmatpush1.msra.mxu0 %v591
        %637 = vmatprep.subr.mxu0 %v594
        %638 = vmatpush1.msra.mxu0 %v593
        %639 = vmatprep.subr.mxu0 %v596
        %640 = vmatpush1.msra.mxu0 %v595
        %641 = vmatprep.subr.mxu0 %v598
        %642 = vmatpush1.msra.mxu0 %v597
        %643 = vmatprep.subr.mxu0 %v600
        %644 = vmatpush1.msra.mxu0 %v599
        %645 = vmatprep.subr.mxu0 0.0
        %646 = vmatpush1.msra.mxu0 0.0
        %647 = vmatprep.subr.mxu0 0.0
        %648 = vmatpush1.msra.mxu0 0.0
        %649 = vmatprep.subr.mxu0 0.0
        %650 = vmatpush1.msra.mxu0 0.0
        %651 = vmatprep.subr.mxu0 0.0
        %652 = vmatpush1.msra.mxu0 0.0
        %653 = vmatprep.subr.mxu0 0.0
        %654 = vmatpush1.msra.mxu0 0.0
        %655 = vmatprep.subr.mxu0 0.0
        %656 = vmatpush1.msra.mxu0 0.0
        %657 = vmatprep.subr.mxu0 0.0
        %658 = vmatpush1.msra.mxu0 0.0
        %659 = vmatprep.subr.mxu0 0.0
        %660 = vmatpush1.msra.mxu0 0.0
        %661 = vmatprep.subr.mxu0 0.0
        %662 = vmatpush1.msra.mxu0 0.0
        %663 = vmatprep.subr.mxu0 0.0
        %664 = vmatpush1.msra.mxu0 0.0
        %665 = vmatprep.subr.mxu0 0.0
        %666 = vmatpush1.msra.mxu0 0.0
        %667 = vmatprep.subr.mxu0 0.0
        %668 = vmatpush1.msra.mxu0 0.0
        %669 = vmatprep.subr.mxu0 0.0
        %670 = vmatpush1.msra.mxu0 0.0
        %671 = vmatprep.subr.mxu0 0.0
        %672 = vmatpush1.msra.mxu0 0.0
        %673 = vmatprep.subr.mxu0 0.0
        %674 = vmatpush1.msra.mxu0 0.0
        %675 = vmatprep.subr.mxu0 0.0
        %676 = vmatpush1.msra.mxu0 0.0
        %677 = vmatprep.mubr.f32.mxu0 0.0
        %678 = vmatmul.mubr.f32.gmra.mrb[0].mxu0 %v553
        %v679 = vpop.f32.mrb[0].mxu0
        %v680 = vadd.f32 %v606, %v679
        %v681 = vpop.f32.mrb[0].mxu0
        %v682 = vadd.f32 %v610, %v681
        %683 = vmatprep.mubr.f32.mxu0 0.0
        %684 = vmatmul.mubr.f32.gmra.mrb[0].mxu0 %v554
        %v685 = vpop.f32.mrb[0].mxu0
        %v686 = vadd.f32 %v606, %v685
        %v687 = vpop.f32.mrb[0].mxu0
        %v688 = vadd.f32 %v610, %v687
        %689 = vmatprep.mubr.f32.mxu0 0.0
        %690 = vmatmul.mubr.f32.gmra.mrb[0].mxu0 %v555
        %v691 = vpop.f32.mrb[0].mxu0
        %v692 = vadd.f32 %v606, %v691
        %v693 = vpop.f32.mrb[0].mxu0
        %v694 = vadd.f32 %v610, %v693
        %695 = vmatprep.mubr.f32.mxu0 0.0
        %696 = vmatmul.mubr.f32.gmra.mrb[0].mxu0 %v556
        %v697 = vpop.f32.mrb[0].mxu0
        %v698 = vadd.f32 %v606, %v697
        %v699 = vpop.f32.mrb[0].mxu0
        %v700 = vadd.f32 %v610, %v699
        %701 = vmatprep.mubr.f32.mxu0 0.0
        %702 = vmatmul.mubr.f32.gmra.mrb[0].mxu0 %v557
        %v703 = vpop.f32.mrb[0].mxu0
        %v704 = vadd.f32 %v606, %v703
        %v705 = vpop.f32.mrb[0].mxu0
        %v706 = vadd.f32 %v610, %v705
        %707 = vmatprep.mubr.f32.mxu0 0.0
        %708 = vmatmul.mubr.f32.gmra.mrb[0].mxu0 %v558
        %v709 = vpop.f32.mrb[0].mxu0
        %v710 = vadd.f32 %v606, %v709
        %v711 = vpop.f32.mrb[0].mxu0
        %v712 = vadd.f32 %v610, %v711
        %713 = vmatprep.mubr.f32.mxu0 0.0
        %714 = vmatmul.mubr.f32.gmra.mrb[0].mxu0 %v559
        %v715 = vpop.f32.mrb[0].mxu0
        %v716 = vadd.f32 %v606, %v715
        %v717 = vpop.f32.mrb[0].mxu0
        %v718 = vadd.f32 %v610, %v717
        %719 = vmatprep.mubr.f32.mxu0 0.0
        %720 = vmatmul.mubr.f32.gmra.mrb[0].mxu0 %v560
        %v721 = vpop.f32.mrb[0].mxu0
        %v722 = vadd.f32 %v606, %v721
        %v723 = vpop.f32.mrb[0].mxu0
        %v724 = vadd.f32 %v610, %v723
        %725 = vmatprep.mubr.f32.mxu0 0.0
        %726 = vmatmul.mubr.f32.gmra.mrb[0].mxu0 %v561
        %v727 = vpop.f32.mrb[0].mxu0
        %v728 = vadd.f32 %v606, %v727
        %v729 = vpop.f32.mrb[0].mxu0
        %v730 = vadd.f32 %v610, %v729
        %731 = vmatprep.mubr.f32.mxu0 0.0
        %732 = vmatmul.mubr.f32.gmra.mrb[0].mxu0 %v562
        %v733 = vpop.f32.mrb[0].mxu0
        %v734 = vadd.f32 %v606, %v733
        %v735 = vpop.f32.mrb[0].mxu0
        %v736 = vadd.f32 %v610, %v735
        %737 = vmatprep.mubr.f32.mxu0 0.0
        %738 = vmatmul.mubr.f32.gmra.mrb[0].mxu0 %v563
        %v739 = vpop.f32.mrb[0].mxu0
        %v740 = vadd.f32 %v606, %v739
        %v741 = vpop.f32.mrb[0].mxu0
        %v742 = vadd.f32 %v610, %v741
        %743 = vmatprep.mubr.f32.mxu0 0.0
        %744 = vmatmul.mubr.f32.gmra.mrb[0].mxu0 %v564
        %v745 = vpop.f32.mrb[0].mxu0
        %v746 = vadd.f32 %v606, %v745
        %v747 = vpop.f32.mrb[0].mxu0
        %v748 = vadd.f32 %v610, %v747
        %749 = vmatprep.mubr.f32.mxu0 0.0
        %750 = vmatmul.mubr.f32.gmra.mrb[0].mxu0 %v565
        %v751 = vpop.f32.mrb[0].mxu0
        %v752 = vadd.f32 %v606, %v751
        %v753 = vpop.f32.mrb[0].mxu0
        %v754 = vadd.f32 %v610, %v753
        %755 = vmatprep.mubr.f32.mxu0 0.0
        %756 = vmatmul.mubr.f32.gmra.mrb[0].mxu0 %v566
        %v757 = vpop.f32.mrb[0].mxu0
        %v758 = vadd.f32 %v606, %v757
        %v759 = vpop.f32.mrb[0].mxu0
        %v760 = vadd.f32 %v610, %v759
        %761 = vmatprep.mubr.f32.mxu0 0.0
        %762 = vmatmul.mubr.f32.gmra.mrb[0].mxu0 %v567
        %v763 = vpop.f32.mrb[0].mxu0
        %v764 = vadd.f32 %v606, %v763
        %v765 = vpop.f32.mrb[0].mxu0
        %v766 = vadd.f32 %v610, %v765
        %767 = vmatprep.mubr.f32.mxu0 0.0
        %768 = vmatmul.mubr.f32.gmra.mrb[0].mxu0 %v568
        %v769 = vpop.f32.mrb[0].mxu0
        %v770 = vadd.f32 %v606, %v769
        %v771 = vpop.f32.mrb[0].mxu0
        %v772 = vadd.f32 %v610, %v771
        %773 = vdwg.mxu0
        %v774 = vmax.f32 %v680, 0.0
        %v775 = vmax.f32 %v682, 0.0
        %v776 = vmax.f32 %v686, 0.0
        %v777 = vmax.f32 %v688, 0.0
        %v778 = vmax.f32 %v692, 0.0
        %v779 = vmax.f32 %v694, 0.0
        %v780 = vmax.f32 %v698, 0.0
        %v781 = vmax.f32 %v700, 0.0
        %v782 = vmax.f32 %v704, 0.0
        %v783 = vmax.f32 %v706, 0.0
        %v784 = vmax.f32 %v710, 0.0
        %v785 = vmax.f32 %v712, 0.0
        %v786 = vmax.f32 %v716, 0.0
        %v787 = vmax.f32 %v718, 0.0
        %v788 = vmax.f32 %v722, 0.0
        %v789 = vmax.f32 %v724, 0.0
        %v790 = vmax.f32 %v728, 0.0
        %v791 = vmax.f32 %v730, 0.0
        %v792 = vmax.f32 %v734, 0.0
        %v793 = vmax.f32 %v736, 0.0
        %v794 = vmax.f32 %v740, 0.0
        %v795 = vmax.f32 %v742, 0.0
        %v796 = vmax.f32 %v746, 0.0
        %v797 = vmax.f32 %v748, 0.0
        %v798 = vmax.f32 %v752, 0.0
        %v799 = vmax.f32 %v754, 0.0
        %v800 = vmax.f32 %v758, 0.0
        %v801 = vmax.f32 %v760, 0.0
        %v802 = vmax.f32 %v764, 0.0
        %v803 = vmax.f32 %v766, 0.0
        %v804 = vmax.f32 %v770, 0.0
        %v805 = vmax.f32 %v772, 0.0
        %v806 = vld [vmem:[#allocation8] sm:$0xff]
        %v807 = vld [vmem:[#allocation8 + $0x8] sm:$0xff]
        %v808 = vld [vmem:[#allocation8 + $0x10] sm:$0xff]
        %v809 = vld [vmem:[#allocation8 + $0x18] sm:$0xff]
        %v810 = vld [vmem:[#allocation8 + $0x20] sm:$0xff]
        %v811 = vld [vmem:[#allocation8 + $0x28] sm:$0xff]
        %v812 = vld [vmem:[#allocation8 + $0x30] sm:$0xff]
        %v813 = vld [vmem:[#allocation8 + $0x38] sm:$0xff]
        %v814 = vld [vmem:[#allocation8 + $0x40] sm:$0xff]
        %v815 = vld [vmem:[#allocation8 + $0x48] sm:$0xff]
        %v816 = vld [vmem:[#allocation8 + $0x50] sm:$0xff]
        %v817 = vld [vmem:[#allocation8 + $0x58] sm:$0xff]
        %v818 = vld [vmem:[#allocation8 + $0x60] sm:$0xff]
        %v819 = vld [vmem:[#allocation8 + $0x68] sm:$0xff]
        %v820 = vld [vmem:[#allocation8 + $0x70] sm:$0xff]
        %v821 = vld [vmem:[#allocation8 + $0x78] sm:$0xff]
        %v822 = vld [vmem:[#allocation8 + $0x80] sm:$0xff]
        %v823 = vld [vmem:[#allocation8 + $0x88] sm:$0xff]
        %v824 = vld [vmem:[#allocation8 + $0x90] sm:$0xff]
        %v825 = vld [vmem:[#allocation8 + $0x98] sm:$0xff]
        %v826 = vld [vmem:[#allocation8 + $0xa0] sm:$0xff]
        %v827 = vld [vmem:[#allocation8 + $0xa8] sm:$0xff]
        %v828 = vld [vmem:[#allocation8 + $0xb0] sm:$0xff]
        %v829 = vld [vmem:[#allocation8 + $0xb8] sm:$0xff]
        %v830 = vld [vmem:[#allocation8 + $0xc0] sm:$0xff]
        %v831 = vld [vmem:[#allocation8 + $0xc8] sm:$0xff]
        %v832 = vld [vmem:[#allocation8 + $0xd0] sm:$0xff]
        %v833 = vld [vmem:[#allocation8 + $0xd8] sm:$0xff]
        %v834 = vld [vmem:[#allocation8 + $0xe0] sm:$0xff]
        %v835 = vld [vmem:[#allocation8 + $0xe8] sm:$0xff]
        %v836 = vld [vmem:[#allocation8 + $0xf0] sm:$0xff]
        %v837 = vld [vmem:[#allocation8 + $0xf8] sm:$0xff]
        %v838 = vld [vmem:[#allocation8 + $0x100] sm:$0xff]
        %v839 = vld [vmem:[#allocation8 + $0x108] sm:$0xff]
        %v840 = vld [vmem:[#allocation8 + $0x110] sm:$0xff]
        %v841 = vld [vmem:[#allocation8 + $0x118] sm:$0xff]
        %v842 = vld [vmem:[#allocation8 + $0x120] sm:$0xff]
        %v843 = vld [vmem:[#allocation8 + $0x128] sm:$0xff]
        %v844 = vld [vmem:[#allocation8 + $0x130] sm:$0xff]
        %v845 = vld [vmem:[#allocation8 + $0x138] sm:$0xff]
        %v846 = vld [vmem:[#allocation8 + $0x140] sm:$0xff]
        %v847 = vld [vmem:[#allocation8 + $0x148] sm:$0xff]
        %v848 = vld [vmem:[#allocation8 + $0x150] sm:$0xff]
        %v849 = vld [vmem:[#allocation8 + $0x158] sm:$0xff]
        %v850 = vld [vmem:[#allocation8 + $0x160] sm:$0xff]
        %v851 = vld [vmem:[#allocation8 + $0x168] sm:$0xff]
        %v852 = vld [vmem:[#allocation8 + $0x170] sm:$0xff]
        %v853 = vld [vmem:[#allocation8 + $0x178] sm:$0xff]
        %v854 = vld [vmem:[#allocation8 + $0x180] sm:$0xff]
        %v855 = vld [vmem:[#allocation8 + $0x188] sm:$0xff]
        %v856 = vld [vmem:[#allocation8 + $0x190] sm:$0xff]
        %v857 = vld [vmem:[#allocation8 + $0x198] sm:$0xff]
        %v858 = vld [vmem:[#allocation8 + $0x1a0] sm:$0xff]
        %v859 = vld [vmem:[#allocation8 + $0x1a8] sm:$0xff]
        %v860 = vld [vmem:[#allocation8 + $0x1b0] sm:$0xff]
        %v861 = vld [vmem:[#allocation8 + $0x1b8] sm:$0xff]
        %v862 = vld [vmem:[#allocation8 + $0x1c0] sm:$0xff]
        %v863 = vld [vmem:[#allocation8 + $0x1c8] sm:$0xff]
        %v864 = vld [vmem:[#allocation8 + $0x1d0] sm:$0xff]
        %v865 = vld [vmem:[#allocation8 + $0x1d8] sm:$0xff]
        %v866 = vld [vmem:[#allocation8 + $0x1e0] sm:$0xff]
        %v867 = vld [vmem:[#allocation8 + $0x1e8] sm:$0xff]
        %v868 = vld [vmem:[#allocation8 + $0x1f0] sm:$0xff]
        %v869 = vld [vmem:[#allocation8 + $0x1f8] sm:$0xff]
        %v870 = vld [vmem:[%s5] sm:$0x3]
        %v872 = vlaneseq
        %v873 = vshrl.u32 %v872, 7
        %v874 = vsub.s32 0, %v873
        %v875 = vrot.slane %v870, %v874
        %v876 = vlaneseq
        %v877 = vshrl.u32 %v876, 7
        %v878 = vsub.s32 1, %v877
        %v879 = vrot.slane %v870, %v878
        %882 = vmatprep.subr.mxu0 %v807
        %883 = vmatpush1.msra.mxu0 %v806
        %884 = vmatprep.subr.mxu0 %v809
        %885 = vmatpush1.msra.mxu0 %v808
        %886 = vmatprep.subr.mxu0 %v811
        %887 = vmatpush1.msra.mxu0 %v810
        %888 = vmatprep.subr.mxu0 %v813
        %889 = vmatpush1.msra.mxu0 %v812
        %890 = vmatprep.subr.mxu0 %v815
        %891 = vmatpush1.msra.mxu0 %v814
        %892 = vmatprep.subr.mxu0 %v817
        %893 = vmatpush1.msra.mxu0 %v816
        %894 = vmatprep.subr.mxu0 %v819
        %895 = vmatpush1.msra.mxu0 %v818
        %896 = vmatprep.subr.mxu0 %v821
        %897 = vmatpush1.msra.mxu0 %v820
        %898 = vmatprep.subr.mxu0 %v823
        %899 = vmatpush1.msra.mxu0 %v822
        %900 = vmatprep.subr.mxu0 %v825
        %901 = vmatpush1.msra.mxu0 %v824
        %902 = vmatprep.subr.mxu0 %v827
        %903 = vmatpush1.msra.mxu0 %v826
        %904 = vmatprep.subr.mxu0 %v829
        %905 = vmatpush1.msra.mxu0 %v828
        %906 = vmatprep.subr.mxu0 %v831
        %907 = vmatpush1.msra.mxu0 %v830
        %908 = vmatprep.subr.mxu0 %v833
        %909 = vmatpush1.msra.mxu0 %v832
        %910 = vmatprep.subr.mxu0 %v835
        %911 = vmatpush1.msra.mxu0 %v834
        %912 = vmatprep.subr.mxu0 %v837
        %913 = vmatpush1.msra.mxu0 %v836
        %914 = vmatprep.subr.mxu0 %v839
        %915 = vmatpush1.msra.mxu0 %v838
        %916 = vmatprep.subr.mxu0 %v841
        %917 = vmatpush1.msra.mxu0 %v840
        %918 = vmatprep.subr.mxu0 %v843
        %919 = vmatpush1.msra.mxu0 %v842
        %920 = vmatprep.subr.mxu0 %v845
        %921 = vmatpush1.msra.mxu0 %v844
        %922 = vmatprep.subr.mxu0 %v847
        %923 = vmatpush1.msra.mxu0 %v846
        %924 = vmatprep.subr.mxu0 %v849
        %925 = vmatpush1.msra.mxu0 %v848
        %926 = vmatprep.subr.mxu0 %v851
        %927 = vmatpush1.msra.mxu0 %v850
        %928 = vmatprep.subr.mxu0 %v853
        %929 = vmatpush1.msra.mxu0 %v852
        %930 = vmatprep.subr.mxu0 %v855
        %931 = vmatpush1.msra.mxu0 %v854
        %932 = vmatprep.subr.mxu0 %v857
        %933 = vmatpush1.msra.mxu0 %v856
        %934 = vmatprep.subr.mxu0 %v859
        %935 = vmatpush1.msra.mxu0 %v858
        %936 = vmatprep.subr.mxu0 %v861
        %937 = vmatpush1.msra.mxu0 %v860
        %938 = vmatprep.subr.mxu0 %v863
        %939 = vmatpush1.msra.mxu0 %v862
        %940 = vmatprep.subr.mxu0 %v865
        %941 = vmatpush1.msra.mxu0 %v864
        %942 = vmatprep.subr.mxu0 %v867
        %943 = vmatpush1.msra.mxu0 %v866
        %944 = vmatprep.subr.mxu0 %v869
        %945 = vmatpush1.msra.mxu0 %v868
        %946 = vmatprep.mubr.f32.mxu0 %v775
        %947 = vmatmul.mubr.f32.gmra.mrb[0].mxu0 %v774
        %v948 = vpop.f32.mrb[0].mxu0
        %v949 = vadd.f32 %v875, %v948
        %v950 = vpop.f32.mrb[0].mxu0
        %v951 = vadd.f32 %v879, %v950
        %952 = vmatprep.mubr.f32.mxu0 %v777
        %953 = vmatmul.mubr.f32.gmra.mrb[0].mxu0 %v776
        %v954 = vpop.f32.mrb[0].mxu0
        %v955 = vadd.f32 %v875, %v954
        %v956 = vpop.f32.mrb[0].mxu0
        %v957 = vadd.f32 %v879, %v956
        %958 = vmatprep.mubr.f32.mxu0 %v779
        %959 = vmatmul.mubr.f32.gmra.mrb[0].mxu0 %v778
        %v960 = vpop.f32.mrb[0].mxu0
        %v961 = vadd.f32 %v875, %v960
        %v962 = vpop.f32.mrb[0].mxu0
        %v963 = vadd.f32 %v879, %v962
        %964 = vmatprep.mubr.f32.mxu0 %v781
        %965 = vmatmul.mubr.f32.gmra.mrb[0].mxu0 %v780
        %v966 = vpop.f32.mrb[0].mxu0
        %v967 = vadd.f32 %v875, %v966
        %v968 = vpop.f32.mrb[0].mxu0
        %v969 = vadd.f32 %v879, %v968
        %970 = vmatprep.mubr.f32.mxu0 %v783
        %971 = vmatmul.mubr.f32.gmra.mrb[0].mxu0 %v782
        %v972 = vpop.f32.mrb[0].mxu0
        %v973 = vadd.f32 %v875, %v972
        %v974 = vpop.f32.mrb[0].mxu0
        %v975 = vadd.f32 %v879, %v974
        %976 = vmatprep.mubr.f32.mxu0 %v785
        %977 = vmatmul.mubr.f32.gmra.mrb[0].mxu0 %v784
        %v978 = vpop.f32.mrb[0].mxu0
        %v979 = vadd.f32 %v875, %v978
        %v980 = vpop.f32.mrb[0].mxu0
        %v981 = vadd.f32 %v879, %v980
        %982 = vmatprep.mubr.f32.mxu0 %v787
        %983 = vmatmul.mubr.f32.gmra.mrb[0].mxu0 %v786
        %v984 = vpop.f32.mrb[0].mxu0
        %v985 = vadd.f32 %v875, %v984
        %v986 = vpop.f32.mrb[0].mxu0
        %v987 = vadd.f32 %v879, %v986
        %988 = vmatprep.mubr.f32.mxu0 %v789
        %989 = vmatmul.mubr.f32.gmra.mrb[0].mxu0 %v788
        %v990 = vpop.f32.mrb[0].mxu0
        %v991 = vadd.f32 %v875, %v990
        %v992 = vpop.f32.mrb[0].mxu0
        %v993 = vadd.f32 %v879, %v992
        %994 = vmatprep.mubr.f32.mxu0 %v791
        %995 = vmatmul.mubr.f32.gmra.mrb[0].mxu0 %v790
        %v996 = vpop.f32.mrb[0].mxu0
        %v997 = vadd.f32 %v875, %v996
        %v998 = vpop.f32.mrb[0].mxu0
        %v999 = vadd.f32 %v879, %v998
        %1000 = vmatprep.mubr.f32.mxu0 %v793
        %1001 = vmatmul.mubr.f32.gmra.mrb[0].mxu0 %v792
        %v1002 = vpop.f32.mrb[0].mxu0
        %v1003 = vadd.f32 %v875, %v1002
        %v1004 = vpop.f32.mrb[0].mxu0
        %v1005 = vadd.f32 %v879, %v1004
        %1006 = vmatprep.mubr.f32.mxu0 %v795
        %1007 = vmatmul.mubr.f32.gmra.mrb[0].mxu0 %v794
        %v1008 = vpop.f32.mrb[0].mxu0
        %v1009 = vadd.f32 %v875, %v1008
        %v1010 = vpop.f32.mrb[0].mxu0
        %v1011 = vadd.f32 %v879, %v1010
        %1012 = vmatprep.mubr.f32.mxu0 %v797
        %1013 = vmatmul.mubr.f32.gmra.mrb[0].mxu0 %v796
        %v1014 = vpop.f32.mrb[0].mxu0
        %v1015 = vadd.f32 %v875, %v1014
        %v1016 = vpop.f32.mrb[0].mxu0
        %v1017 = vadd.f32 %v879, %v1016
        %1018 = vmatprep.mubr.f32.mxu0 %v799
        %1019 = vmatmul.mubr.f32.gmra.mrb[0].mxu0 %v798
        %v1020 = vpop.f32.mrb[0].mxu0
        %v1021 = vadd.f32 %v875, %v1020
        %v1022 = vpop.f32.mrb[0].mxu0
        %v1023 = vadd.f32 %v879, %v1022
        %1024 = vmatprep.mubr.f32.mxu0 %v801
        %1025 = vmatmul.mubr.f32.gmra.mrb[0].mxu0 %v800
        %v1026 = vpop.f32.mrb[0].mxu0
        %v1027 = vadd.f32 %v875, %v1026
        %v1028 = vpop.f32.mrb[0].mxu0
        %v1029 = vadd.f32 %v879, %v1028
        %1030 = vmatprep.mubr.f32.mxu0 %v803
        %1031 = vmatmul.mubr.f32.gmra.mrb[0].mxu0 %v802
        %v1032 = vpop.f32.mrb[0].mxu0
        %v1033 = vadd.f32 %v875, %v1032
        %v1034 = vpop.f32.mrb[0].mxu0
        %v1035 = vadd.f32 %v879, %v1034
        %1036 = vmatprep.mubr.f32.mxu0 %v805
        %1037 = vmatmul.mubr.f32.gmra.mrb[0].mxu0 %v804
        %v1038 = vpop.f32.mrb[0].mxu0
        %v1039 = vadd.f32 %v875, %v1038
        %v1040 = vpop.f32.mrb[0].mxu0
        %v1041 = vadd.f32 %v879, %v1040
        %1042 = vdwg.mxu0
        %v1043 = vmul.f32 %v951, 0.5
        %v1044 = vmul.f32 %v957, 0.5
        %v1045 = vmul.f32 %v963, 0.5
        %v1046 = vmul.f32 %v969, 0.5
        %v1047 = vmul.f32 %v975, 0.5
        %v1048 = vmul.f32 %v981, 0.5
        %v1049 = vmul.f32 %v987, 0.5
        %v1050 = vmul.f32 %v993, 0.5
        %v1051 = vmul.f32 %v999, 0.5
        %v1052 = vmul.f32 %v1005, 0.5
        %v1053 = vmul.f32 %v1011, 0.5
        %v1054 = vmul.f32 %v1017, 0.5
        %v1055 = vmul.f32 %v1023, 0.5
        %v1056 = vmul.f32 %v1029, 0.5
        %v1057 = vmul.f32 %v1035, 0.5
        %v1058 = vmul.f32 %v1041, 0.5
        %v1059 = vmul.f32 %v1043, 1.442695
        %v1060 = vpow.pop %v1059
        %v1061 = vmul.f32 %v1044, 1.442695
        %v1062 = vpow.pop %v1061
        %v1063 = vmul.f32 %v1045, 1.442695
        %v1064 = vpow.pop %v1063
        %v1065 = vmul.f32 %v1046, 1.442695
        %v1066 = vpow.pop %v1065
        %v1067 = vmul.f32 %v1047, 1.442695
        %v1068 = vpow.pop %v1067
        %v1069 = vmul.f32 %v1048, 1.442695
        %v1070 = vpow.pop %v1069
        %v1071 = vmul.f32 %v1049, 1.442695
        %v1072 = vpow.pop %v1071
        %v1073 = vmul.f32 %v1050, 1.442695
        %v1074 = vpow.pop %v1073
        %v1075 = vmul.f32 %v1051, 1.442695
        %v1076 = vpow.pop %v1075
        %v1077 = vmul.f32 %v1052, 1.442695
        %v1078 = vpow.pop %v1077
        %v1079 = vmul.f32 %v1053, 1.442695
        %v1080 = vpow.pop %v1079
        %v1081 = vmul.f32 %v1054, 1.442695
        %v1082 = vpow.pop %v1081
        %v1083 = vmul.f32 %v1055, 1.442695
        %v1084 = vpow.pop %v1083
        %v1085 = vmul.f32 %v1056, 1.442695
        %v1086 = vpow.pop %v1085
        %v1087 = vmul.f32 %v1057, 1.442695
        %v1088 = vpow.pop %v1087
        %v1089 = vmul.f32 %v1058, 1.442695
        %v1090 = vpow.pop %v1089
        %v1091 = vld [vmem:[%s476] sm:$0xff]
        %v1092 = vld [vmem:[%s476 + $0x8] sm:$0xff]
        %v1093 = vld [vmem:[%s476 + $0x10] sm:$0xff]
        %v1094 = vld [vmem:[%s476 + $0x18] sm:$0xff]
        %v1095 = vld [vmem:[%s476 + $0x20] sm:$0xff]
        %v1096 = vld [vmem:[%s476 + $0x28] sm:$0xff]
        %v1097 = vld [vmem:[%s476 + $0x30] sm:$0xff]
        %v1098 = vld [vmem:[%s476 + $0x38] sm:$0xff]
        %v1099 = vld [vmem:[%s476 + $0x40] sm:$0xff]
        %v1100 = vld [vmem:[%s476 + $0x48] sm:$0xff]
        %v1101 = vld [vmem:[%s476 + $0x50] sm:$0xff]
        %v1102 = vld [vmem:[%s476 + $0x58] sm:$0xff]
        %v1103 = vld [vmem:[%s476 + $0x60] sm:$0xff]
        %v1104 = vld [vmem:[%s476 + $0x68] sm:$0xff]
        %v1105 = vld [vmem:[%s476 + $0x70] sm:$0xff]
        %v1106 = vld [vmem:[%s476 + $0x78] sm:$0xff]
        %v1107 = vmul.f32 %v1091, %v1060
        %v1108 = vmul.f32 %v1092, %v1062
        %v1109 = vmul.f32 %v1093, %v1064
        %v1110 = vmul.f32 %v1094, %v1066
        %v1111 = vmul.f32 %v1095, %v1068
        %v1112 = vmul.f32 %v1096, %v1070
        %v1113 = vmul.f32 %v1097, %v1072
        %v1114 = vmul.f32 %v1098, %v1074
        %v1115 = vmul.f32 %v1099, %v1076
        %v1116 = vmul.f32 %v1100, %v1078
        %v1117 = vmul.f32 %v1101, %v1080
        %v1118 = vmul.f32 %v1102, %v1082
        %v1119 = vmul.f32 %v1103, %v1084
        %v1120 = vmul.f32 %v1104, %v1086
        %v1121 = vmul.f32 %v1105, %v1088
        %v1122 = vmul.f32 %v1106, %v1090
        %v1123 = vadd.f32 %v1107, %v949
        %v1124 = vadd.f32 %v1108, %v955
        %v1125 = vadd.f32 %v1109, %v961
        %v1126 = vadd.f32 %v1110, %v967
        %v1127 = vadd.f32 %v1111, %v973
        %v1128 = vadd.f32 %v1112, %v979
        %v1129 = vadd.f32 %v1113, %v985
        %v1130 = vadd.f32 %v1114, %v991
        %v1131 = vadd.f32 %v1115, %v997
        %v1132 = vadd.f32 %v1116, %v1003
        %v1133 = vadd.f32 %v1117, %v1009
        %v1134 = vadd.f32 %v1118, %v1015
        %v1135 = vadd.f32 %v1119, %v1021
        %v1136 = vadd.f32 %v1120, %v1027
        %v1137 = vadd.f32 %v1121, %v1033
        %v1138 = vadd.f32 %v1122, %v1039
        %v1139 = vld [vmem:[#allocation10] sm:$0xff]
        %v1140 = vld [vmem:[#allocation10 + $0x8] sm:$0xff]
        %v1141 = vld [vmem:[#allocation10 + $0x10] sm:$0xff]
        %v1142 = vld [vmem:[#allocation10 + $0x18] sm:$0xff]
        %v1143 = vld [vmem:[#allocation10 + $0x20] sm:$0xff]
        %v1144 = vld [vmem:[#allocation10 + $0x28] sm:$0xff]
        %v1145 = vld [vmem:[#allocation10 + $0x30] sm:$0xff]
        %v1146 = vld [vmem:[#allocation10 + $0x38] sm:$0xff]
        %v1147 = vld [vmem:[#allocation10 + $0x40] sm:$0xff]
        %v1148 = vld [vmem:[#allocation10 + $0x48] sm:$0xff]
        %v1149 = vld [vmem:[#allocation10 + $0x50] sm:$0xff]
        %v1150 = vld [vmem:[#allocation10 + $0x58] sm:$0xff]
        %v1151 = vld [vmem:[#allocation10 + $0x60] sm:$0xff]
        %v1152 = vld [vmem:[#allocation10 + $0x68] sm:$0xff]
        %v1153 = vld [vmem:[#allocation10 + $0x70] sm:$0xff]
        %v1154 = vld [vmem:[#allocation10 + $0x78] sm:$0xff]
        %v1155 = vld [vmem:[#allocation10 + $0x80] sm:$0xff]
        %v1156 = vld [vmem:[#allocation10 + $0x88] sm:$0xff]
        %v1157 = vld [vmem:[#allocation10 + $0x90] sm:$0xff]
        %v1158 = vld [vmem:[#allocation10 + $0x98] sm:$0xff]
        %v1159 = vld [vmem:[#allocation10 + $0xa0] sm:$0xff]
        %v1160 = vld [vmem:[#allocation10 + $0xa8] sm:$0xff]
        %v1161 = vld [vmem:[#allocation10 + $0xb0] sm:$0xff]
        %v1162 = vld [vmem:[#allocation10 + $0xb8] sm:$0xff]
        %v1163 = vld [vmem:[#allocation10 + $0xc0] sm:$0xff]
        %v1164 = vld [vmem:[#allocation10 + $0xc8] sm:$0xff]
        %v1165 = vld [vmem:[#allocation10 + $0xd0] sm:$0xff]
        %v1166 = vld [vmem:[#allocation10 + $0xd8] sm:$0xff]
        %v1167 = vld [vmem:[#allocation10 + $0xe0] sm:$0xff]
        %v1168 = vld [vmem:[#allocation10 + $0xe8] sm:$0xff]
        %v1169 = vld [vmem:[#allocation10 + $0xf0] sm:$0xff]
        %v1170 = vld [vmem:[#allocation10 + $0xf8] sm:$0xff]
        %v1171 = vld [vmem:[%s7] sm:$0x3]
        %v1173 = vlaneseq
        %v1174 = vshrl.u32 %v1173, 7
        %v1175 = vsub.s32 0, %v1174
        %v1176 = vrot.slane %v1171, %v1175
        %v1177 = vlaneseq
        %v1178 = vshrl.u32 %v1177, 7
        %v1179 = vsub.s32 1, %v1178
        %v1180 = vrot.slane %v1171, %v1179
        %1183 = vmatprep.subr.mxu0 %v1140
        %1184 = vmatpush1.msra.mxu0 %v1139
        %1185 = vmatprep.subr.mxu0 %v1142
        %1186 = vmatpush1.msra.mxu0 %v1141
        %1187 = vmatprep.subr.mxu0 %v1144
        %1188 = vmatpush1.msra.mxu0 %v1143
        %1189 = vmatprep.subr.mxu0 %v1146
        %1190 = vmatpush1.msra.mxu0 %v1145
        %1191 = vmatprep.subr.mxu0 %v1148
        %1192 = vmatpush1.msra.mxu0 %v1147
        %1193 = vmatprep.subr.mxu0 %v1150
        %1194 = vmatpush1.msra.mxu0 %v1149
        %1195 = vmatprep.subr.mxu0 %v1152
        %1196 = vmatpush1.msra.mxu0 %v1151
        %1197 = vmatprep.subr.mxu0 %v1154
        %1198 = vmatpush1.msra.mxu0 %v1153
        %1199 = vmatprep.subr.mxu0 %v1156
        %1200 = vmatpush1.msra.mxu0 %v1155
        %1201 = vmatprep.subr.mxu0 %v1158
        %1202 = vmatpush1.msra.mxu0 %v1157
        %1203 = vmatprep.subr.mxu0 %v1160
        %1204 = vmatpush1.msra.mxu0 %v1159
        %1205 = vmatprep.subr.mxu0 %v1162
        %1206 = vmatpush1.msra.mxu0 %v1161
        %1207 = vmatprep.subr.mxu0 %v1164
        %1208 = vmatpush1.msra.mxu0 %v1163
        %1209 = vmatprep.subr.mxu0 %v1166
        %1210 = vmatpush1.msra.mxu0 %v1165
        %1211 = vmatprep.subr.mxu0 %v1168
        %1212 = vmatpush1.msra.mxu0 %v1167
        %1213 = vmatprep.subr.mxu0 %v1170
        %1214 = vmatpush1.msra.mxu0 %v1169
        %1215 = vmatprep.subr.mxu0 0.0
        %1216 = vmatpush1.msra.mxu0 0.0
        %1217 = vmatprep.subr.mxu0 0.0
        %1218 = vmatpush1.msra.mxu0 0.0
        %1219 = vmatprep.subr.mxu0 0.0
        %1220 = vmatpush1.msra.mxu0 0.0
        %1221 = vmatprep.subr.mxu0 0.0
        %1222 = vmatpush1.msra.mxu0 0.0
        %1223 = vmatprep.subr.mxu0 0.0
        %1224 = vmatpush1.msra.mxu0 0.0
        %1225 = vmatprep.subr.mxu0 0.0
        %1226 = vmatpush1.msra.mxu0 0.0
        %1227 = vmatprep.subr.mxu0 0.0
        %1228 = vmatpush1.msra.mxu0 0.0
        %1229 = vmatprep.subr.mxu0 0.0
        %1230 = vmatpush1.msra.mxu0 0.0
        %1231 = vmatprep.subr.mxu0 0.0
        %1232 = vmatpush1.msra.mxu0 0.0
        %1233 = vmatprep.subr.mxu0 0.0
        %1234 = vmatpush1.msra.mxu0 0.0
        %1235 = vmatprep.subr.mxu0 0.0
        %1236 = vmatpush1.msra.mxu0 0.0
        %1237 = vmatprep.subr.mxu0 0.0
        %1238 = vmatpush1.msra.mxu0 0.0
        %1239 = vmatprep.subr.mxu0 0.0
        %1240 = vmatpush1.msra.mxu0 0.0
        %1241 = vmatprep.subr.mxu0 0.0
        %1242 = vmatpush1.msra.mxu0 0.0
        %1243 = vmatprep.subr.mxu0 0.0
        %1244 = vmatpush1.msra.mxu0 0.0
        %1245 = vmatprep.subr.mxu0 0.0
        %1246 = vmatpush1.msra.mxu0 0.0
        %1247 = vmatprep.mubr.f32.mxu0 0.0
        %1248 = vmatmul.mubr.f32.gmra.mrb[0].mxu0 %v1123
        %v1249 = vpop.f32.mrb[0].mxu0
        %v1250 = vadd.f32 %v1176, %v1249
        %v1251 = vpop.f32.mrb[0].mxu0
        %v1252 = vadd.f32 %v1180, %v1251
        %1253 = vmatprep.mubr.f32.mxu0 0.0
        %1254 = vmatmul.mubr.f32.gmra.mrb[0].mxu0 %v1124
        %v1255 = vpop.f32.mrb[0].mxu0
        %v1256 = vadd.f32 %v1176, %v1255
        %v1257 = vpop.f32.mrb[0].mxu0
        %v1258 = vadd.f32 %v1180, %v1257
        %1259 = vmatprep.mubr.f32.mxu0 0.0
        %1260 = vmatmul.mubr.f32.gmra.mrb[0].mxu0 %v1125
        %v1261 = vpop.f32.mrb[0].mxu0
        %v1262 = vadd.f32 %v1176, %v1261
        %v1263 = vpop.f32.mrb[0].mxu0
        %v1264 = vadd.f32 %v1180, %v1263
        %1265 = vmatprep.mubr.f32.mxu0 0.0
        %1266 = vmatmul.mubr.f32.gmra.mrb[0].mxu0 %v1126
        %v1267 = vpop.f32.mrb[0].mxu0
        %v1268 = vadd.f32 %v1176, %v1267
        %v1269 = vpop.f32.mrb[0].mxu0
        %v1270 = vadd.f32 %v1180, %v1269
        %1271 = vmatprep.mubr.f32.mxu0 0.0
        %1272 = vmatmul.mubr.f32.gmra.mrb[0].mxu0 %v1127
        %v1273 = vpop.f32.mrb[0].mxu0
        %v1274 = vadd.f32 %v1176, %v1273
        %v1275 = vpop.f32.mrb[0].mxu0
        %v1276 = vadd.f32 %v1180, %v1275
        %1277 = vmatprep.mubr.f32.mxu0 0.0
        %1278 = vmatmul.mubr.f32.gmra.mrb[0].mxu0 %v1128
        %v1279 = vpop.f32.mrb[0].mxu0
        %v1280 = vadd.f32 %v1176, %v1279
        %v1281 = vpop.f32.mrb[0].mxu0
        %v1282 = vadd.f32 %v1180, %v1281
        %1283 = vmatprep.mubr.f32.mxu0 0.0
        %1284 = vmatmul.mubr.f32.gmra.mrb[0].mxu0 %v1129
        %v1285 = vpop.f32.mrb[0].mxu0
        %v1286 = vadd.f32 %v1176, %v1285
        %v1287 = vpop.f32.mrb[0].mxu0
        %v1288 = vadd.f32 %v1180, %v1287
        %1289 = vmatprep.mubr.f32.mxu0 0.0
        %1290 = vmatmul.mubr.f32.gmra.mrb[0].mxu0 %v1130
        %v1291 = vpop.f32.mrb[0].mxu0
        %v1292 = vadd.f32 %v1176, %v1291
        %v1293 = vpop.f32.mrb[0].mxu0
        %v1294 = vadd.f32 %v1180, %v1293
        %1295 = vmatprep.mubr.f32.mxu0 0.0
        %1296 = vmatmul.mubr.f32.gmra.mrb[0].mxu0 %v1131
        %v1297 = vpop.f32.mrb[0].mxu0
        %v1298 = vadd.f32 %v1176, %v1297
        %v1299 = vpop.f32.mrb[0].mxu0
        %v1300 = vadd.f32 %v1180, %v1299
        %1301 = vmatprep.mubr.f32.mxu0 0.0
        %1302 = vmatmul.mubr.f32.gmra.mrb[0].mxu0 %v1132
        %v1303 = vpop.f32.mrb[0].mxu0
        %v1304 = vadd.f32 %v1176, %v1303
        %v1305 = vpop.f32.mrb[0].mxu0
        %v1306 = vadd.f32 %v1180, %v1305
        %1307 = vmatprep.mubr.f32.mxu0 0.0
        %1308 = vmatmul.mubr.f32.gmra.mrb[0].mxu0 %v1133
        %v1309 = vpop.f32.mrb[0].mxu0
        %v1310 = vadd.f32 %v1176, %v1309
        %v1311 = vpop.f32.mrb[0].mxu0
        %v1312 = vadd.f32 %v1180, %v1311
        %1313 = vmatprep.mubr.f32.mxu0 0.0
        %1314 = vmatmul.mubr.f32.gmra.mrb[0].mxu0 %v1134
        %v1315 = vpop.f32.mrb[0].mxu0
        %v1316 = vadd.f32 %v1176, %v1315
        %v1317 = vpop.f32.mrb[0].mxu0
        %v1318 = vadd.f32 %v1180, %v1317
        %1319 = vmatprep.mubr.f32.mxu0 0.0
        %1320 = vmatmul.mubr.f32.gmra.mrb[0].mxu0 %v1135
        %v1321 = vpop.f32.mrb[0].mxu0
        %v1322 = vadd.f32 %v1176, %v1321
        %v1323 = vpop.f32.mrb[0].mxu0
        %v1324 = vadd.f32 %v1180, %v1323
        %1325 = vmatprep.mubr.f32.mxu0 0.0
        %1326 = vmatmul.mubr.f32.gmra.mrb[0].mxu0 %v1136
        %v1327 = vpop.f32.mrb[0].mxu0
        %v1328 = vadd.f32 %v1176, %v1327
        %v1329 = vpop.f32.mrb[0].mxu0
        %v1330 = vadd.f32 %v1180, %v1329
        %1331 = vmatprep.mubr.f32.mxu0 0.0
        %1332 = vmatmul.mubr.f32.gmra.mrb[0].mxu0 %v1137
        %v1333 = vpop.f32.mrb[0].mxu0
        %v1334 = vadd.f32 %v1176, %v1333
        %v1335 = vpop.f32.mrb[0].mxu0
        %v1336 = vadd.f32 %v1180, %v1335
        %1337 = vmatprep.mubr.f32.mxu0 0.0
        %1338 = vmatmul.mubr.f32.gmra.mrb[0].mxu0 %v1138
        %v1339 = vpop.f32.mrb[0].mxu0
        %v1340 = vadd.f32 %v1176, %v1339
        %v1341 = vpop.f32.mrb[0].mxu0
        %v1342 = vadd.f32 %v1180, %v1341
        %1343 = vdwg.mxu0
        %v1344 = vmax.f32 %v1250, 0.0
        %v1345 = vmax.f32 %v1252, 0.0
        %v1346 = vmax.f32 %v1256, 0.0
        %v1347 = vmax.f32 %v1258, 0.0
        %v1348 = vmax.f32 %v1262, 0.0
        %v1349 = vmax.f32 %v1264, 0.0
        %v1350 = vmax.f32 %v1268, 0.0
        %v1351 = vmax.f32 %v1270, 0.0
        %v1352 = vmax.f32 %v1274, 0.0
        %v1353 = vmax.f32 %v1276, 0.0
        %v1354 = vmax.f32 %v1280, 0.0
        %v1355 = vmax.f32 %v1282, 0.0
        %v1356 = vmax.f32 %v1286, 0.0
        %v1357 = vmax.f32 %v1288, 0.0
        %v1358 = vmax.f32 %v1292, 0.0
        %v1359 = vmax.f32 %v1294, 0.0
        %v1360 = vmax.f32 %v1298, 0.0
        %v1361 = vmax.f32 %v1300, 0.0
        %v1362 = vmax.f32 %v1304, 0.0
        %v1363 = vmax.f32 %v1306, 0.0
        %v1364 = vmax.f32 %v1310, 0.0
        %v1365 = vmax.f32 %v1312, 0.0
        %v1366 = vmax.f32 %v1316, 0.0
        %v1367 = vmax.f32 %v1318, 0.0
        %v1368 = vmax.f32 %v1322, 0.0
        %v1369 = vmax.f32 %v1324, 0.0
        %v1370 = vmax.f32 %v1328, 0.0
        %v1371 = vmax.f32 %v1330, 0.0
        %v1372 = vmax.f32 %v1334, 0.0
        %v1373 = vmax.f32 %v1336, 0.0
        %v1374 = vmax.f32 %v1340, 0.0
        %v1375 = vmax.f32 %v1342, 0.0
        %v1376 = vld [vmem:[#allocation11] sm:$0xff]
        %v1377 = vld [vmem:[#allocation11 + $0x8] sm:$0xff]
        %v1378 = vld [vmem:[#allocation11 + $0x10] sm:$0xff]
        %v1379 = vld [vmem:[#allocation11 + $0x18] sm:$0xff]
        %v1380 = vld [vmem:[#allocation11 + $0x20] sm:$0xff]
        %v1381 = vld [vmem:[#allocation11 + $0x28] sm:$0xff]
        %v1382 = vld [vmem:[#allocation11 + $0x30] sm:$0xff]
        %v1383 = vld [vmem:[#allocation11 + $0x38] sm:$0xff]
        %v1384 = vld [vmem:[#allocation11 + $0x40] sm:$0xff]
        %v1385 = vld [vmem:[#allocation11 + $0x48] sm:$0xff]
        %v1386 = vld [vmem:[#allocation11 + $0x50] sm:$0xff]
        %v1387 = vld [vmem:[#allocation11 + $0x58] sm:$0xff]
        %v1388 = vld [vmem:[#allocation11 + $0x60] sm:$0xff]
        %v1389 = vld [vmem:[#allocation11 + $0x68] sm:$0xff]
        %v1390 = vld [vmem:[#allocation11 + $0x70] sm:$0xff]
        %v1391 = vld [vmem:[#allocation11 + $0x78] sm:$0xff]
        %v1392 = vld [vmem:[#allocation11 + $0x80] sm:$0xff]
        %v1393 = vld [vmem:[#allocation11 + $0x88] sm:$0xff]
        %v1394 = vld [vmem:[#allocation11 + $0x90] sm:$0xff]
        %v1395 = vld [vmem:[#allocation11 + $0x98] sm:$0xff]
        %v1396 = vld [vmem:[#allocation11 + $0xa0] sm:$0xff]
        %v1397 = vld [vmem:[#allocation11 + $0xa8] sm:$0xff]
        %v1398 = vld [vmem:[#allocation11 + $0xb0] sm:$0xff]
        %v1399 = vld [vmem:[#allocation11 + $0xb8] sm:$0xff]
        %v1400 = vld [vmem:[#allocation11 + $0xc0] sm:$0xff]
        %v1401 = vld [vmem:[#allocation11 + $0xc8] sm:$0xff]
        %v1402 = vld [vmem:[#allocation11 + $0xd0] sm:$0xff]
        %v1403 = vld [vmem:[#allocation11 + $0xd8] sm:$0xff]
        %v1404 = vld [vmem:[#allocation11 + $0xe0] sm:$0xff]
        %v1405 = vld [vmem:[#allocation11 + $0xe8] sm:$0xff]
        %v1406 = vld [vmem:[#allocation11 + $0xf0] sm:$0xff]
        %v1407 = vld [vmem:[#allocation11 + $0xf8] sm:$0xff]
        %v1408 = vld [vmem:[%s9] sm:$0x1]
        %v1410 = vlaneseq
        %v1411 = vshrl.u32 %v1410, 7
        %v1412 = vsub.s32 0, %v1411
        %v1413 = vrot.slane %v1408, %v1412
        %1415 = vmatprep.subr.mxu0 0.0
        %1416 = vmatpush1.msra.mxu0 %v1376
        %1417 = vmatprep.subr.mxu0 0.0
        %1418 = vmatpush1.msra.mxu0 %v1377
        %1419 = vmatprep.subr.mxu0 0.0
        %1420 = vmatpush1.msra.mxu0 %v1378
        %1421 = vmatprep.subr.mxu0 0.0
        %1422 = vmatpush1.msra.mxu0 %v1379
        %1423 = vmatprep.subr.mxu0 0.0
        %1424 = vmatpush1.msra.mxu0 %v1380
        %1425 = vmatprep.subr.mxu0 0.0
        %1426 = vmatpush1.msra.mxu0 %v1381
        %1427 = vmatprep.subr.mxu0 0.0
        %1428 = vmatpush1.msra.mxu0 %v1382
        %1429 = vmatprep.subr.mxu0 0.0
        %1430 = vmatpush1.msra.mxu0 %v1383
        %1431 = vmatprep.subr.mxu0 0.0
        %1432 = vmatpush1.msra.mxu0 %v1384
        %1433 = vmatprep.subr.mxu0 0.0
        %1434 = vmatpush1.msra.mxu0 %v1385
        %1435 = vmatprep.subr.mxu0 0.0
        %1436 = vmatpush1.msra.mxu0 %v1386
        %1437 = vmatprep.subr.mxu0 0.0
        %1438 = vmatpush1.msra.mxu0 %v1387
        %1439 = vmatprep.subr.mxu0 0.0
        %1440 = vmatpush1.msra.mxu0 %v1388
        %1441 = vmatprep.subr.mxu0 0.0
        %1442 = vmatpush1.msra.mxu0 %v1389
        %1443 = vmatprep.subr.mxu0 0.0
        %1444 = vmatpush1.msra.mxu0 %v1390
        %1445 = vmatprep.subr.mxu0 0.0
        %1446 = vmatpush1.msra.mxu0 %v1391
        %1447 = vmatprep.subr.mxu0 0.0
        %1448 = vmatpush1.msra.mxu0 %v1392
        %1449 = vmatprep.subr.mxu0 0.0
        %1450 = vmatpush1.msra.mxu0 %v1393
        %1451 = vmatprep.subr.mxu0 0.0
        %1452 = vmatpush1.msra.mxu0 %v1394
        %1453 = vmatprep.subr.mxu0 0.0
        %1454 = vmatpush1.msra.mxu0 %v1395
        %1455 = vmatprep.subr.mxu0 0.0
        %1456 = vmatpush1.msra.mxu0 %v1396
        %1457 = vmatprep.subr.mxu0 0.0
        %1458 = vmatpush1.msra.mxu0 %v1397
        %1459 = vmatprep.subr.mxu0 0.0
        %1460 = vmatpush1.msra.mxu0 %v1398
        %1461 = vmatprep.subr.mxu0 0.0
        %1462 = vmatpush1.msra.mxu0 %v1399
        %1463 = vmatprep.subr.mxu0 0.0
        %1464 = vmatpush1.msra.mxu0 %v1400
        %1465 = vmatprep.subr.mxu0 0.0
        %1466 = vmatpush1.msra.mxu0 %v1401
        %1467 = vmatprep.subr.mxu0 0.0
        %1468 = vmatpush1.msra.mxu0 %v1402
        %1469 = vmatprep.subr.mxu0 0.0
        %1470 = vmatpush1.msra.mxu0 %v1403
        %1471 = vmatprep.subr.mxu0 0.0
        %1472 = vmatpush1.msra.mxu0 %v1404
        %1473 = vmatprep.subr.mxu0 0.0
        %1474 = vmatpush1.msra.mxu0 %v1405
        %1475 = vmatprep.subr.mxu0 0.0
        %1476 = vmatpush1.msra.mxu0 %v1406
        %1477 = vmatprep.subr.mxu0 0.0
        %1478 = vmatpush1.msra.mxu0 %v1407
        %1479 = vmatprep.mubr.f32.mxu0 %v1345
        %1480 = vmatmul.mubr.f32.gmra.mrb[0].mxu0 %v1344
        %v1481 = vpop.f32.mrb[0].mxu0
        %v1482 = vadd.f32 %v1413, %v1481
        %v1483 = vpop.f32.mrb[0].mxu0
        %1484 = vmatprep.mubr.f32.mxu0 %v1347
        %1485 = vmatmul.mubr.f32.gmra.mrb[0].mxu0 %v1346
        %v1486 = vpop.f32.mrb[0].mxu0
        %v1487 = vadd.f32 %v1413, %v1486
        %v1488 = vpop.f32.mrb[0].mxu0
        %1489 = vmatprep.mubr.f32.mxu0 %v1349
        %1490 = vmatmul.mubr.f32.gmra.mrb[0].mxu0 %v1348
        %v1491 = vpop.f32.mrb[0].mxu0
        %v1492 = vadd.f32 %v1413, %v1491
        %v1493 = vpop.f32.mrb[0].mxu0
        %1494 = vmatprep.mubr.f32.mxu0 %v1351
        %1495 = vmatmul.mubr.f32.gmra.mrb[0].mxu0 %v1350
        %v1496 = vpop.f32.mrb[0].mxu0
        %v1497 = vadd.f32 %v1413, %v1496
        %v1498 = vpop.f32.mrb[0].mxu0
        %1499 = vmatprep.mubr.f32.mxu0 %v1353
        %1500 = vmatmul.mubr.f32.gmra.mrb[0].mxu0 %v1352
        %v1501 = vpop.f32.mrb[0].mxu0
        %v1502 = vadd.f32 %v1413, %v1501
        %v1503 = vpop.f32.mrb[0].mxu0
        %1504 = vmatprep.mubr.f32.mxu0 %v1355
        %1505 = vmatmul.mubr.f32.gmra.mrb[0].mxu0 %v1354
        %v1506 = vpop.f32.mrb[0].mxu0
        %v1507 = vadd.f32 %v1413, %v1506
        %v1508 = vpop.f32.mrb[0].mxu0
        %1509 = vmatprep.mubr.f32.mxu0 %v1357
        %1510 = vmatmul.mubr.f32.gmra.mrb[0].mxu0 %v1356
        %v1511 = vpop.f32.mrb[0].mxu0
        %v1512 = vadd.f32 %v1413, %v1511
        %v1513 = vpop.f32.mrb[0].mxu0
        %1514 = vmatprep.mubr.f32.mxu0 %v1359
        %1515 = vmatmul.mubr.f32.gmra.mrb[0].mxu0 %v1358
        %v1516 = vpop.f32.mrb[0].mxu0
        %v1517 = vadd.f32 %v1413, %v1516
        %v1518 = vpop.f32.mrb[0].mxu0
        %1519 = vmatprep.mubr.f32.mxu0 %v1361
        %1520 = vmatmul.mubr.f32.gmra.mrb[0].mxu0 %v1360
        %v1521 = vpop.f32.mrb[0].mxu0
        %v1522 = vadd.f32 %v1413, %v1521
        %v1523 = vpop.f32.mrb[0].mxu0
        %1524 = vmatprep.mubr.f32.mxu0 %v1363
        %1525 = vmatmul.mubr.f32.gmra.mrb[0].mxu0 %v1362
        %v1526 = vpop.f32.mrb[0].mxu0
        %v1527 = vadd.f32 %v1413, %v1526
        %v1528 = vpop.f32.mrb[0].mxu0
        %1529 = vmatprep.mubr.f32.mxu0 %v1365
        %1530 = vmatmul.mubr.f32.gmra.mrb[0].mxu0 %v1364
        %v1531 = vpop.f32.mrb[0].mxu0
        %v1532 = vadd.f32 %v1413, %v1531
        %v1533 = vpop.f32.mrb[0].mxu0
        %1534 = vmatprep.mubr.f32.mxu0 %v1367
        %1535 = vmatmul.mubr.f32.gmra.mrb[0].mxu0 %v1366
        %v1536 = vpop.f32.mrb[0].mxu0
        %v1537 = vadd.f32 %v1413, %v1536
        %v1538 = vpop.f32.mrb[0].mxu0
        %1539 = vmatprep.mubr.f32.mxu0 %v1369
        %1540 = vmatmul.mubr.f32.gmra.mrb[0].mxu0 %v1368
        %v1541 = vpop.f32.mrb[0].mxu0
        %v1542 = vadd.f32 %v1413, %v1541
        %v1543 = vpop.f32.mrb[0].mxu0
        %1544 = vmatprep.mubr.f32.mxu0 %v1371
        %1545 = vmatmul.mubr.f32.gmra.mrb[0].mxu0 %v1370
        %v1546 = vpop.f32.mrb[0].mxu0
        %v1547 = vadd.f32 %v1413, %v1546
        %v1548 = vpop.f32.mrb[0].mxu0
        %1549 = vmatprep.mubr.f32.mxu0 %v1373
        %1550 = vmatmul.mubr.f32.gmra.mrb[0].mxu0 %v1372
        %v1551 = vpop.f32.mrb[0].mxu0
        %v1552 = vadd.f32 %v1413, %v1551
        %v1553 = vpop.f32.mrb[0].mxu0
        %1554 = vmatprep.mubr.f32.mxu0 %v1375
        %1555 = vmatmul.mubr.f32.gmra.mrb[0].mxu0 %v1374
        %v1556 = vpop.f32.mrb[0].mxu0
        %v1557 = vadd.f32 %v1413, %v1556
        %v1558 = vpop.f32.mrb[0].mxu0
        %1559 = vdwg.mxu0
        %v1560 = vxor.u32 %v1482, 2147483648
        %v1561 = vxor.u32 %v1487, 2147483648
        %v1562 = vxor.u32 %v1492, 2147483648
        %v1563 = vxor.u32 %v1497, 2147483648
        %v1564 = vxor.u32 %v1502, 2147483648
        %v1565 = vxor.u32 %v1507, 2147483648
        %v1566 = vxor.u32 %v1512, 2147483648
        %v1567 = vxor.u32 %v1517, 2147483648
        %v1568 = vxor.u32 %v1522, 2147483648
        %v1569 = vxor.u32 %v1527, 2147483648
        %v1570 = vxor.u32 %v1532, 2147483648
        %v1571 = vxor.u32 %v1537, 2147483648
        %v1572 = vxor.u32 %v1542, 2147483648
        %v1573 = vxor.u32 %v1547, 2147483648
        %v1574 = vxor.u32 %v1552, 2147483648
        %v1575 = vxor.u32 %v1557, 2147483648
        %v1576 = vmul.f32 %v1560, 1.442695
        %v1577 = vpow.pop %v1576
        %v1578 = vmul.f32 %v1561, 1.442695
        %v1579 = vpow.pop %v1578
        %v1580 = vmul.f32 %v1562, 1.442695
        %v1581 = vpow.pop %v1580
        %v1582 = vmul.f32 %v1563, 1.442695
        %v1583 = vpow.pop %v1582
        %v1584 = vmul.f32 %v1564, 1.442695
        %v1585 = vpow.pop %v1584
        %v1586 = vmul.f32 %v1565, 1.442695
        %v1587 = vpow.pop %v1586
        %v1588 = vmul.f32 %v1566, 1.442695
        %v1589 = vpow.pop %v1588
        %v1590 = vmul.f32 %v1567, 1.442695
        %v1591 = vpow.pop %v1590
        %v1592 = vmul.f32 %v1568, 1.442695
        %v1593 = vpow.pop %v1592
        %v1594 = vmul.f32 %v1569, 1.442695
        %v1595 = vpow.pop %v1594
        %v1596 = vmul.f32 %v1570, 1.442695
        %v1597 = vpow.pop %v1596
        %v1598 = vmul.f32 %v1571, 1.442695
        %v1599 = vpow.pop %v1598
        %v1600 = vmul.f32 %v1572, 1.442695
        %v1601 = vpow.pop %v1600
        %v1602 = vmul.f32 %v1573, 1.442695
        %v1603 = vpow.pop %v1602
        %v1604 = vmul.f32 %v1574, 1.442695
        %v1605 = vpow.pop %v1604
        %v1606 = vmul.f32 %v1575, 1.442695
        %v1607 = vpow.pop %v1606
        %v1608 = vadd.f32 %v1577, 1.0
        %v1609 = vadd.f32 %v1579, 1.0
        %v1610 = vadd.f32 %v1581, 1.0
        %v1611 = vadd.f32 %v1583, 1.0
        %v1612 = vadd.f32 %v1585, 1.0
        %v1613 = vadd.f32 %v1587, 1.0
        %v1614 = vadd.f32 %v1589, 1.0
        %v1615 = vadd.f32 %v1591, 1.0
        %v1616 = vadd.f32 %v1593, 1.0
        %v1617 = vadd.f32 %v1595, 1.0
        %v1618 = vadd.f32 %v1597, 1.0
        %v1619 = vadd.f32 %v1599, 1.0
        %v1620 = vadd.f32 %v1601, 1.0
        %v1621 = vadd.f32 %v1603, 1.0
        %v1622 = vadd.f32 %v1605, 1.0
        %v1623 = vadd.f32 %v1607, 1.0
        %v1624 = vrcp.pop %v1608
        %v1625 = vmul.f32 1.0, %v1624
        %v1626 = vrcp.pop %v1609
        %v1627 = vmul.f32 1.0, %v1626
        %v1628 = vrcp.pop %v1610
        %v1629 = vmul.f32 1.0, %v1628
        %v1630 = vrcp.pop %v1611
        %v1631 = vmul.f32 1.0, %v1630
        %v1632 = vrcp.pop %v1612
        %v1633 = vmul.f32 1.0, %v1632
        %v1634 = vrcp.pop %v1613
        %v1635 = vmul.f32 1.0, %v1634
        %v1636 = vrcp.pop %v1614
        %v1637 = vmul.f32 1.0, %v1636
        %v1638 = vrcp.pop %v1615
        %v1639 = vmul.f32 1.0, %v1638
        %v1640 = vrcp.pop %v1616
        %v1641 = vmul.f32 1.0, %v1640
        %v1642 = vrcp.pop %v1617
        %v1643 = vmul.f32 1.0, %v1642
        %v1644 = vrcp.pop %v1618
        %v1645 = vmul.f32 1.0, %v1644
        %v1646 = vrcp.pop %v1619
        %v1647 = vmul.f32 1.0, %v1646
        %v1648 = vrcp.pop %v1620
        %v1649 = vmul.f32 1.0, %v1648
        %v1650 = vrcp.pop %v1621
        %v1651 = vmul.f32 1.0, %v1650
        %v1652 = vrcp.pop %v1622
        %v1653 = vmul.f32 1.0, %v1652
        %v1654 = vrcp.pop %v1623
        %v1655 = vmul.f32 1.0, %v1654
        %1656 = vst [vmem:[%s533] sm:$0xff] %v1625
        %1657 = vst [vmem:[%s533 + $0x8] sm:$0xff] %v1627
        %1658 = vst [vmem:[%s533 + $0x10] sm:$0xff] %v1629
        %1659 = vst [vmem:[%s533 + $0x18] sm:$0xff] %v1631
        %1660 = vst [vmem:[%s533 + $0x20] sm:$0xff] %v1633
        %1661 = vst [vmem:[%s533 + $0x28] sm:$0xff] %v1635
        %1662 = vst [vmem:[%s533 + $0x30] sm:$0xff] %v1637
        %1663 = vst [vmem:[%s533 + $0x38] sm:$0xff] %v1639
        %1664 = vst [vmem:[%s533 + $0x40] sm:$0xff] %v1641
        %1665 = vst [vmem:[%s533 + $0x48] sm:$0xff] %v1643
        %1666 = vst [vmem:[%s533 + $0x50] sm:$0xff] %v1645
        %1667 = vst [vmem:[%s533 + $0x58] sm:$0xff] %v1647
        %1668 = vst [vmem:[%s533 + $0x60] sm:$0xff] %v1649
        %1669 = vst [vmem:[%s533 + $0x68] sm:$0xff] %v1651
        %1670 = vst [vmem:[%s533 + $0x70] sm:$0xff] %v1653
        %1671 = vst [vmem:[%s533 + $0x78] sm:$0xff] %v1655
        %1672 = vst [vmem:[%s540] sm:$0xff] %v949
        %1673 = vst [vmem:[%s540 + $0x8] sm:$0xff] %v955
        %1674 = vst [vmem:[%s540 + $0x10] sm:$0xff] %v961
        %1675 = vst [vmem:[%s540 + $0x18] sm:$0xff] %v967
        %1676 = vst [vmem:[%s540 + $0x20] sm:$0xff] %v973
        %1677 = vst [vmem:[%s540 + $0x28] sm:$0xff] %v979
        %1678 = vst [vmem:[%s540 + $0x30] sm:$0xff] %v985
        %1679 = vst [vmem:[%s540 + $0x38] sm:$0xff] %v991
        %1680 = vst [vmem:[%s540 + $0x40] sm:$0xff] %v997
        %1681 = vst [vmem:[%s540 + $0x48] sm:$0xff] %v1003
        %1682 = vst [vmem:[%s540 + $0x50] sm:$0xff] %v1009
        %1683 = vst [vmem:[%s540 + $0x58] sm:$0xff] %v1015
        %1684 = vst [vmem:[%s540 + $0x60] sm:$0xff] %v1021
        %1685 = vst [vmem:[%s540 + $0x68] sm:$0xff] %v1027
        %1686 = vst [vmem:[%s540 + $0x70] sm:$0xff] %v1033
        %1687 = vst [vmem:[%s540 + $0x78] sm:$0xff] %v1039
        %1688 = vst [vmem:[%s547] sm:$0xff] %v951
        %1689 = vst [vmem:[%s547 + $0x8] sm:$0xff] %v957
        %1690 = vst [vmem:[%s547 + $0x10] sm:$0xff] %v963
        %1691 = vst [vmem:[%s547 + $0x18] sm:$0xff] %v969
        %1692 = vst [vmem:[%s547 + $0x20] sm:$0xff] %v975
        %1693 = vst [vmem:[%s547 + $0x28] sm:$0xff] %v981
        %1694 = vst [vmem:[%s547 + $0x30] sm:$0xff] %v987
        %1695 = vst [vmem:[%s547 + $0x38] sm:$0xff] %v993
        %1696 = vst [vmem:[%s547 + $0x40] sm:$0xff] %v999
        %1697 = vst [vmem:[%s547 + $0x48] sm:$0xff] %v1005
        %1698 = vst [vmem:[%s547 + $0x50] sm:$0xff] %v1011
        %1699 = vst [vmem:[%s547 + $0x58] sm:$0xff] %v1017
        %1700 = vst [vmem:[%s547 + $0x60] sm:$0xff] %v1023
        %1701 = vst [vmem:[%s547 + $0x68] sm:$0xff] %v1029
        %1702 = vst [vmem:[%s547 + $0x70] sm:$0xff] %v1035
        %1703 = vst [vmem:[%s547 + $0x78] sm:$0xff] %v1041
        %s1704 = sand.u32 %s266, 1
        %s1705 = scalar_lea.sflag [#allocation4], %s1704
        %s1706 = sand.u32 %s266, 1
        %s1707 = smul.addr %s1706, 128
        %s1708 = scalar_lea.vmem [#allocation13], %s1707
        %s1709 = sand.u32 %s38, 1
        %s1710 = scalar_lea.sflag [#allocation15], %s1709
        %s1711 = sand.u32 %s292, 1
        %s1712 = smul.addr %s1711, 128
        %s1713 = scalar_lea.vmem [#allocation14], %s1712
        %s1714 = sand.u32 %s38, 1
        %s1715 = scalar_lea.sflag [#allocation15], %s1714
        %s1716 = sand.u32 %s318, 1
        %s1717 = smul.addr %s1716, 128
        %s1718 = scalar_lea.vmem [#allocation16], %s1717
        // Predicated region
        $region85: #{tpu_custom_call.1} parent=59 // pred_check
          %p1719 = pneg %p276
        $region86: #{tpu_custom_call.1} parent=59 // pred_check_branch
          %1721 = sbr.rel (%p1719) target = $region88
        $region87: #{tpu_custom_call.1} parent=59 // pred_region
          %s1722 = smul.u32 16, %s38
          %s1724 = ssub.s32 2048, 2048
          %1725 = vsyncadd %s1705, %s1724
          %s1726 = smul.addr %s1722, 128
          %s1727 = scalar_lea.hbm %s10, %s1726
          %s1728 = sshll.u32 %s1708, 4
          %s1729 = int_to_ptr.vmem [resolvable:$true] %s1728
          %1734 = dma.vmem_to_hbm [thread:$0]  %s1729, 2048, %s1727, %s1705, 128, 128, 8
        $region88: #{tpu_custom_call.1} parent=59 // pred_fallthru
          _
        // Predicated region
        $region89: #{tpu_custom_call.1} parent=59 // pred_check
          %p1735 = pneg %p302
        $region90: #{tpu_custom_call.1} parent=59 // pred_check_branch
          %1737 = sbr.rel (%p1735) target = $region92
        $region91: #{tpu_custom_call.1} parent=59 // pred_region
          %s1738 = smul.u32 16, %s38
          %s1740 = ssub.s32 2048, 2048
          %1741 = vsyncadd %s1710, %s1740
          %s1742 = smul.addr %s1738, 128
          %s1743 = scalar_lea.hbm %s11, %s1742
          %s1744 = sshll.u32 %s1713, 4
          %s1745 = int_to_ptr.vmem [resolvable:$true] %s1744
          %1750 = dma.vmem_to_hbm [thread:$0]  %s1745, 2048, %s1743, %s1710, 128, 128, 8
        $region92: #{tpu_custom_call.1} parent=59 // pred_fallthru
          _
        // Predicated region
        $region93: #{tpu_custom_call.1} parent=59 // pred_check
          %p1751 = pneg %p328
        $region94: #{tpu_custom_call.1} parent=59 // pred_check_branch
          %1753 = sbr.rel (%p1751) target = $region96
        $region95: #{tpu_custom_call.1} parent=59 // pred_region
          %s1754 = smul.u32 16, %s38
          %s1756 = ssub.s32 2048, 2048
          %1757 = vsyncadd %s1715, %s1756
          %s1758 = smul.addr %s1754, 128
          %s1759 = scalar_lea.hbm %s12, %s1758
          %s1760 = sshll.u32 %s1718, 4
          %s1761 = int_to_ptr.vmem [resolvable:$true] %s1760
          %1766 = dma.vmem_to_hbm [thread:$0]  %s1761, 2048, %s1759, %s1715, 128, 128, 8
        $region96: #{tpu_custom_call.1} parent=59 // pred_fallthru
          _
      $region60: #{tpu_custom_call.1} parent=5 // pred_fallthru
        _
      %p1767 = scmp.le.s32.totalorder 2, %s33
      // Predicated region
      $region97: #{tpu_custom_call.1} parent=5 // pred_check
        %p1768 = pneg %p1767
      $region98: #{tpu_custom_call.1} parent=5 // pred_check_branch
        %1770 = sbr.rel (%p1768) target = $region100
      $region99: #{tpu_custom_call.1} parent=5 // pred_region
        %s1771 = ssub.s32 %s33, 2
        // Predicated region
        $region101: #{tpu_custom_call.1} parent=99 // pred_check
          %p1772 = pneg %p282
        $region102: #{tpu_custom_call.1} parent=99 // pred_check_branch
          %1774 = sbr.rel (%p1772) target = $region104
        $region103: #{tpu_custom_call.1} parent=99 // pred_region
          %s1775 = sand.u32 %s267, 1
          %s1776 = scalar_lea.sflag [#allocation4], %s1775
          %s1777 = sand.u32 %s267, 1
          %s1778 = smul.addr %s1777, 128
          %s1779 = scalar_lea.vmem [#allocation13], %s1778
          %1780 = dma.done %s1776, 2048
        $region104: #{tpu_custom_call.1} parent=99 // pred_fallthru
          _
        // Predicated region
        $region105: #{tpu_custom_call.1} parent=99 // pred_check
          %p1781 = pneg %p308
        $region106: #{tpu_custom_call.1} parent=99 // pred_check_branch
          %1783 = sbr.rel (%p1781) target = $region108
        $region107: #{tpu_custom_call.1} parent=99 // pred_region
          %s1784 = sand.u32 %s39, 1
          %s1785 = scalar_lea.sflag [#allocation15], %s1784
          %s1786 = sand.u32 %s293, 1
          %s1787 = smul.addr %s1786, 128
          %s1788 = scalar_lea.vmem [#allocation14], %s1787
          %1789 = dma.done %s1785, 2048
        $region108: #{tpu_custom_call.1} parent=99 // pred_fallthru
          _
        // Predicated region
        $region109: #{tpu_custom_call.1} parent=99 // pred_check
          %p1790 = pneg %p334
        $region110: #{tpu_custom_call.1} parent=99 // pred_check_branch
          %1792 = sbr.rel (%p1790) target = $region112
        $region111: #{tpu_custom_call.1} parent=99 // pred_region
          %s1793 = sand.u32 %s39, 1
          %s1794 = scalar_lea.sflag [#allocation15], %s1793
          %s1795 = sand.u32 %s319, 1
          %s1796 = smul.addr %s1795, 128
          %s1797 = scalar_lea.vmem [#allocation16], %s1796
          %1798 = dma.done %s1794, 2048
        $region112: #{tpu_custom_call.1} parent=99 // pred_fallthru
          _
      $region100: #{tpu_custom_call.1} parent=5 // pred_fallthru
        _
    $region6: #{tpu_custom_call.1} parent=1 // loop_footer
      %s37 = sadd.s32 1, %s33
    $region7: #{tpu_custom_call.1} parent=1 // loop_footer_branch
      %32 = sbr.rel target = $region3
    $region8: #{tpu_custom_call.1} parent=1 // loop_exit
      _
    %1799 = vsyncpa [#allocation3], 1
    %s1800 = scalar_lea.sflag [#allocation3], 1
    %1801 = vsyncpa %s1800, 1
    %1802 = vsyncpa [#allocation6], 1
    %s1803 = scalar_lea.sflag [#allocation6], 1
    %1804 = vsyncpa %s1803, 1
    %1805 = vsyncpa [#allocation9], 1
    %1806 = vsyncpa [#allocation12], 1
    %1807 = vsyncpa [#allocation4], 1
    %s1808 = scalar_lea.sflag [#allocation4], 1
    %1809 = vsyncpa %s1808, 1
    %1810 = vsyncpa [#allocation15], 1
    %s1811 = scalar_lea.sflag [#allocation15], 1
    %1812 = vsyncpa %s1811, 1

</llo_original>
